<compile_context>
chip_gen: v5e
topology: v5e:2x2
jax: 0.10.0
libtpu: 0.0.40
codegen_flags: <defaults>
</compile_context>

<pallas_src>
import jax
import jax.numpy as jnp
from jax.experimental import pallas as pl
from jax.experimental.pallas import tpu as pltpu

EPS = 1e-5  # nn.LayerNorm default eps


def _round_up(a, m):
    return ((a + m - 1) // m) * m


def _vmem_limit_bytes():
    # ~75% of physical VMEM: v5e/v6e (128 MiB) -> 96 MiB, v7x (64 MiB) -> 48 MiB.
    cap = 64 * 1024 * 1024
    try:
        info = pltpu.get_tpu_info()
        cap = int(getattr(info, "vmem_capacity_bytes", cap))
    except Exception:
        pass
    return max(32 * 1024 * 1024, (cap * 3) // 4)


def prenorm_linear_kernel(x_ref, w_ref, b_ref, o_ref):
    # x_ref: (TILE_R, C) tile of the flattened (B*N, C) rows.
    x = x_ref[...].astype(jnp.float32)

    # LayerNorm statistics in f32 (biased variance, matches torch.nn.LayerNorm).
    mean = jnp.mean(x, axis=-1, keepdims=True)
    centered = x - mean
    var = jnp.mean(centered * centered, axis=-1, keepdims=True)
    xn = centered * jax.lax.rsqrt(var + EPS)

    # gamma is folded into w_ref rows and beta into b_ref (done in the wrapper),
    # so no per-element affine here. MXU fed in the weight's native dtype
    # (bf16 on v6e/v7x) with f32 accumulation.
    y = jnp.dot(xn.astype(w_ref.dtype), w_ref[...],
                preferred_element_type=jnp.float32)
    o_ref[...] = (y + b_ref[...]).astype(o_ref.dtype)


def prenorm_linear(x, gamma, beta, w_t, bias, *, tile_rows=512):
    """x: (B, N, C); gamma/beta: (1, C); w_t: (C, Cout) = W.T; bias: (1, Cout)."""
    B, N, C = x.shape
    Cin, Cout = w_t.shape
    assert Cin == C, "weight inner dim must match channel dim"

    # One-time f32 prep (grid-resident results):
    #   (xn*gamma + beta) @ W^T + b  ==  xn @ (gamma_k * W^T)  +  (beta @ W^T + b)
    gamma32 = gamma.reshape(C, 1).astype(jnp.float32)
    beta32 = beta.reshape(1, C).astype(jnp.float32)
    w32 = w_t.astype(jnp.float32)
    w_eff = (w32 * gamma32).astype(w_t.dtype)                      # (C, Cout)
    b_eff = beta32 @ w32 + bias.reshape(1, Cout).astype(jnp.float32)  # (1, Cout) f32

    # Flatten batch*seq into one row axis (free, contiguous reshape).
    rows = B * N
    x2 = x.reshape(rows, C)

    # Row tile: align so sub-32-bit rows stay fully packed per sublane
    # (bf16 -> 16 rows, f32 -> 8 rows).
    row_align = 8 * max(1, 4 // jnp.dtype(x.dtype).itemsize)
    tile_r = min(tile_rows, _round_up(rows, row_align))
    tile_r = _round_up(tile_r, row_align)

    grid = (pl.cdiv(rows, tile_r),)
    padded_rows = grid[0] * tile_r

    # Single-buffer the resident weight only when double-buffering it would
    # meaningfully eat VMEM (large-C path); otherwise keep the default pipeline.
    w_bytes = C * Cout * jnp.dtype(w_t.dtype).itemsize
    w_pipeline = pl.Buffered(1) if 2 * w_bytes > (8 * 1024 * 1024) else None

    itemsize = jnp.dtype(x.dtype).itemsize
    cost = pl.CostEstimate(
        flops=2 * padded_rows * C * Cout,
        transcendentals=padded_rows,  # one rsqrt per row
        bytes_accessed=(padded_rows * C * itemsize          # x read
                        + padded_rows * Cout * itemsize     # out write
                        + w_bytes                            # resident W^T
                        + Cout * 4),                         # effective bias (f32)
    )

    out = pl.pallas_call(
        prenorm_linear_kernel,
        out_shape=jax.ShapeDtypeStruct((rows, Cout), x.dtype),
        grid_spec=pltpu.PrefetchScalarGridSpec(
            num_scalar_prefetch=0,
            grid=grid,
            in_specs=[
                pl.BlockSpec((tile_r, C), lambda r: (r, 0)),           # x rows (streamed)
                pl.BlockSpec((C, Cout), lambda r: (0, 0),
                             pipeline_mode=w_pipeline),                # W_eff (resident)
                pl.BlockSpec((1, Cout), lambda r: (0, 0)),             # b_eff (resident)
            ],
            out_specs=pl.BlockSpec((tile_r, Cout), lambda r: (r, 0)),  # lane-dense out
        ),
        compiler_params=pltpu.CompilerParams(
            dimension_semantics=("parallel",),
            vmem_limit_bytes=_vmem_limit_bytes(),
        ),
        cost_estimate=cost,
    )(x2, w_eff, b_eff)

    return out.reshape(B, N, Cout)


def prenorm_linear_ref(x, gamma, beta, w_t, bias):
    """Pure-JAX f32 reference (LayerNorm + Linear), torch semantics."""
    x32 = x.astype(jnp.float32)
    mean = jnp.mean(x32, axis=-1, keepdims=True)
    var = jnp.mean((x32 - mean) ** 2, axis=-1, keepdims=True)
    xn = (x32 - mean) / jnp.sqrt(var + EPS)
    xn = xn * gamma.reshape(1, 1, -1).astype(jnp.float32) + beta.reshape(1, 1, -1).astype(jnp.float32)
    return xn @ w_t.astype(jnp.float32) + bias.reshape(1, 1, -1).astype(jnp.float32)


if __name__ == "__main__":
    # "b, N, c" MLP path: batch=2, seq=512, dim=128 (lane-dense multiple of 128).
    # Flattened rows = 1024, tile_rows = 512 -> 2 grid steps.
    B, N, C = 2, 512, 128
    Cout = C
    key = jax.random.PRNGKey(0)
    kx, kw, kb, kg, kbe = jax.random.split(key, 5)

    x = jax.random.normal(kx, (B, N, C), dtype=jnp.float32).astype(jnp.bfloat16)

    # nn.LayerNorm(dim) affine params (non-trivial to exercise the gamma/beta fold).
    gamma = (1.0 + 0.1 * jax.random.normal(kg, (1, C), dtype=jnp.float32))
    beta = 0.05 * jax.random.normal(kbe, (1, C), dtype=jnp.float32)

    # fn = Linear(dim, dim): deterministic synthetic weights, bf16 for the MXU.
    w = jax.random.normal(kw, (Cout, C), dtype=jnp.float32) * 0.05   # (out, in) PyTorch layout
    b = jax.random.normal(kb, (Cout,), dtype=jnp.float32) * 0.01
    w_t = w.T.astype(jnp.bfloat16)        # (in, out) so kernel computes x @ W^T
    bias = b.reshape(1, Cout)

    out = prenorm_linear(x, gamma, beta, w_t, bias, tile_rows=512)
    out = jax.block_until_ready(out)

    ref = prenorm_linear_ref(x, gamma, beta, w_t, bias)
    assert out.shape == (B, N, Cout)
    err = jnp.max(jnp.abs(out.astype(jnp.float32) - ref))
    assert jnp.allclose(out.astype(jnp.float32), ref, atol=3e-2, rtol=3e-2), (
        f"mismatch vs reference, max abs err = {err}")

    print("KERNEL_OK")
</pallas_src>

<mosaic_0001>
module attributes {stable_mosaic.version = 11 : i64} {
  func.func @prenorm_linear_kernel(%arg0: i32, %arg1: memref<512x128xbf16, #tpu.memory_space<vmem>>, %arg2: memref<128x128xbf16, #tpu.memory_space<vmem>>, %arg3: memref<1x128xf32, #tpu.memory_space<vmem>>, %arg4: memref<512x128xbf16, #tpu.memory_space<vmem>>) attributes {dimension_semantics = [#tpu.dimension_semantics<parallel>], iteration_bounds = array<i64: 2>, scalar_prefetch = 0 : i64, scratch_operands = 0 : i64, tpu.core_type = #tpu.core_type<tc>, window_params = [{transform_indices = @transform_0, window_bounds = array<i64: 512, 128>}, {pipeline_mode = #tpu.pipeline_mode<synchronous>, transform_indices = @transform_1, window_bounds = array<i64: 128, 128>}, {pipeline_mode = #tpu.pipeline_mode<synchronous>, transform_indices = @transform_2, window_bounds = array<i64: 1, 128>}, {transform_indices = @transform_3, window_bounds = array<i64: 512, 128>}]} {
    %c0 = arith.constant 0 : index
    %c0_0 = arith.constant 0 : index
    %0 = vector.load %arg1[%c0, %c0_0] : memref<512x128xbf16, #tpu.memory_space<vmem>>, vector<512x128xbf16>
    %1 = arith.extf %0 : vector<512x128xbf16> to vector<512x128xf32>
    %cst = arith.constant dense<0.000000e+00> : vector<512xf32>
    %2 = vector.multi_reduction <add>, %1, %cst [1] : vector<512x128xf32> to vector<512xf32>
    %3 = vector.shape_cast %2 : vector<512xf32> to vector<512x1xf32>
    %cst_1 = arith.constant 1.280000e+02 : f32
    %4 = vector.broadcast %cst_1 : f32 to vector<512x1xf32>
    %5 = arith.divf %3, %4 : vector<512x1xf32>
    %6 = vector.broadcast %5 : vector<512x1xf32> to vector<512x128xf32>
    %7 = arith.subf %1, %6 : vector<512x128xf32>
    %8 = arith.mulf %7, %7 : vector<512x128xf32>
    %cst_2 = arith.constant dense<0.000000e+00> : vector<512xf32>
    %9 = vector.multi_reduction <add>, %8, %cst_2 [1] : vector<512x128xf32> to vector<512xf32>
    %10 = vector.shape_cast %9 : vector<512xf32> to vector<512x1xf32>
    %cst_3 = arith.constant 1.280000e+02 : f32
    %11 = vector.broadcast %cst_3 : f32 to vector<512x1xf32>
    %12 = arith.divf %10, %11 : vector<512x1xf32>
    %cst_4 = arith.constant 9.99999974E-6 : f32
    %13 = vector.broadcast %cst_4 : f32 to vector<512x1xf32>
    %14 = arith.addf %12, %13 : vector<512x1xf32>
    %15 = math.rsqrt %14 : vector<512x1xf32>
    %16 = vector.broadcast %15 : vector<512x1xf32> to vector<512x128xf32>
    %17 = arith.mulf %7, %16 : vector<512x128xf32>
    %18 = arith.truncf %17 : vector<512x128xf32> to vector<512x128xbf16>
    %c0_5 = arith.constant 0 : index
    %c0_6 = arith.constant 0 : index
    %19 = vector.load %arg2[%c0_5, %c0_6] : memref<128x128xbf16, #tpu.memory_space<vmem>>, vector<128x128xbf16>
    %cst_7 = arith.constant dense<0.000000e+00> : vector<512x128xf32>
    %20 = tpu.matmul %18, %19, %cst_7 {dimension_numbers = #tpu.dot_dimension_numbers<[1], [0], [0], [1], [0, 0, 1, 1], [], []>} : vector<512x128xbf16>, vector<128x128xbf16>, vector<512x128xf32> -> vector<512x128xf32>
    %c0_8 = arith.constant 0 : index
    %c0_9 = arith.constant 0 : index
    %21 = vector.load %arg3[%c0_8, %c0_9] : memref<1x128xf32, #tpu.memory_space<vmem>>, vector<1x128xf32>
    %22 = vector.broadcast %21 : vector<1x128xf32> to vector<512x128xf32>
    %23 = arith.addf %20, %22 : vector<512x128xf32>
    %24 = arith.truncf %23 : vector<512x128xf32> to vector<512x128xbf16>
    %c0_10 = arith.constant 0 : index
    %c0_11 = arith.constant 0 : index
    %25 = vector.load %arg4[%c0_10, %c0_11] : memref<512x128xbf16, #tpu.memory_space<vmem>>, vector<512x128xbf16>
    tpu.vector_store %arg4[%c0_10, %c0_11], %24 {strides = array<i32>} : memref<512x128xbf16, #tpu.memory_space<vmem>>, vector<512x128xbf16>,
    return
  }
  func.func @transform_0(%arg0: i32) -> (i32, i32) {
    %c0_i32 = arith.constant 0 : i32
    %c0_i32_0 = arith.constant 0 : i32
    return %arg0, %c0_i32 : i32, i32
  }
  func.func @transform_1(%arg0: i32) -> (i32, i32) {
    %c0_i32 = arith.constant 0 : i32
    %c0_i32_0 = arith.constant 0 : i32
    %c0_i32_1 = arith.constant 0 : i32
    return %c0_i32, %c0_i32_0 : i32, i32
  }
  func.func @transform_2(%arg0: i32) -> (i32, i32) {
    %c0_i32 = arith.constant 0 : i32
    %c0_i32_0 = arith.constant 0 : i32
    %c0_i32_1 = arith.constant 0 : i32
    return %c0_i32, %c0_i32_0 : i32, i32
  }
  func.func @transform_3(%arg0: i32) -> (i32, i32) {
    %c0_i32 = arith.constant 0 : i32
    %c0_i32_0 = arith.constant 0 : i32
    return %arg0, %c0_i32 : i32, i32
  }
}

</mosaic_0001>

<llo_original>
// kernel: tpu_custom_call.1
$region0: #{tpu_custom_call.1}
  #allocation0 [shape = 'u32[]', space=smem, size = 0x4, offset = 0x4, fixed_abs, tag = 'smem constant byte address 0x4 - core index']
  #allocation1 [shape = 'u32[72,128]{1,0:T(1,128)}', space=vmem, size = 0x9000, scoped, tag = 'internal scratch']
  %s0 = inlined_call_operand.hbm [shape: bf16[1024,128], index: 0, kind: input, shape index: {}]
  %s1 = inlined_call_operand.hbm [shape: bf16[128,128], index: 1, kind: input, shape index: {}]
  %s2 = inlined_call_operand.vmem [shape: f32[1,128], index: 2, kind: input, shape index: {}]
  %s3 = inlined_call_operand.hbm [shape: bf16[1024,128], index: 3, kind: output, shape index: {}]
  %s4 = sld [smem:[#allocation0]]
  $region53: #{tpu_custom_call.1} parent=0
    _
  %s6 = ssub.s32 1, %s4
  %s7 = scalar_select 0, %s6, %s4
  $region1: #{tpu_custom_call.1} parent=0
    #allocation2 [shape = 'u8[262144]{0}', space=vmem, size = 0x40000, scoped, tag = 'input window, operand 0']
    #allocation3 [shape = 's32[2]{0}', space=sflag, size = 0x8, scoped, tag = 'scoped memory for tpu_custom_call.1']
    #allocation4 [shape = 's32[2]{0}', space=sflag, size = 0x8, scoped, tag = 'scoped memory for tpu_custom_call.1']
    #allocation5 [shape = 'u8[32768]{0}', space=vmem, size = 0x8000, scoped, tag = 'input window, operand 1, single buffered']
    #allocation6 [shape = 's32[1]{0}', space=sflag, size = 0x4, scoped, tag = 'scoped memory for tpu_custom_call.1']
    #allocation7 [shape = 'u8[262144]{0}', space=vmem, size = 0x40000, scoped, tag = 'output window, operand 0']
    %8 = vsyncpa [#allocation3], 0
    %s9 = scalar_lea.sflag [#allocation3], 1
    %10 = vsyncpa %s9, 0
    %11 = vsyncpa [#allocation6], 0
    %12 = vsyncpa [#allocation4], 0
    %s13 = scalar_lea.sflag [#allocation4], 1
    %14 = vsyncpa %s13, 0
    loop: start=0, step=1, limit=4
    $region2: #{tpu_custom_call.1} parent=1 // loop_pre_header
      _
    $region3: #{tpu_custom_call.1} parent=1 // loop_header
      %s16 = sphi 0, %s20
      %p17 = scmp.ge.s32.totalorder %s16, 4
      %s26 = sphi 0, %s28
      %s29 = sphi 0, %s26
      %s30 = sphi 0, %s29
      %s46 = sphi 0, %s30
      %s50 = sphi 0, %s50
      %s52 = sphi 0, %s50
      %s53 = sphi 0, %s52
      %s67 = sphi 0, %s53
      %s71 = sphi 0, %s71
      %s73 = sphi 0, %s71
      %s74 = sphi 0, %s73
      %s88 = sphi 0, %s74
      %s94 = sphi 0, %s96
      %s97 = sphi 0, %s94
      %s98 = sphi 0, %s97
      %s114 = sphi 0, %s98
    $region4: #{tpu_custom_call.1} parent=1 // loop_header_branch
      %19 = sbr.rel (%p17) target = $region8
    $region5: #{tpu_custom_call.1} parent=1 // loop_body
      %s21 = ssub.s32 %s16, 1
      %s22 = ssub.s32 %s16, 2
      %s23 = sadd.s32 %s16, 1
      %s24 = ssub.s32 %s16, %s23
      %p25 = scmp.eq.s32.totalorder %s24, 0
      %s27 = sadd.s32 %s26, 1
      %s28 = scalar_select %p25, %s26, %s27
      %p31 = pneg %p25
      %p32 = scmp.eq.s32.totalorder %s16, 1
      %p33 = por %p31, %p32
      %p34 = scmp.ne.s32.totalorder %s26, %s29
      %p35 = scmp.eq.s32.totalorder %s16, 0
      %p36 = por %p34, %p35
      %p37 = scmp.ne.s32.totalorder %s26, %s29
      %p38 = scmp.eq.s32.totalorder %s21, 1
      %p39 = por %p37, %p38
      %p40 = scmp.ne.s32.totalorder %s29, %s30
      %p41 = scmp.eq.s32.totalorder %s21, 0
      %p42 = por %p40, %p41
      %p43 = scmp.ne.s32.totalorder %s29, %s30
      %p44 = scmp.eq.s32.totalorder %s22, 1
      %p45 = por %p43, %p44
      %p47 = scmp.ne.s32.totalorder %s30, %s46
      %p48 = scmp.eq.s32.totalorder %s22, 0
      %p49 = por %p47, %p48
      %s51 = sadd.s32 %s50, 1
      %p54 = scmp.eq.s32.totalorder %s16, 1
      %p55 = scmp.ne.s32.totalorder %s50, %s52
      %p56 = scmp.eq.s32.totalorder %s16, 0
      %p57 = por %p55, %p56
      %p58 = scmp.ne.s32.totalorder %s50, %s52
      %p59 = scmp.eq.s32.totalorder %s21, 1
      %p60 = por %p58, %p59
      %p61 = scmp.ne.s32.totalorder %s52, %s53
      %p62 = scmp.eq.s32.totalorder %s21, 0
      %p63 = por %p61, %p62
      %p64 = scmp.ne.s32.totalorder %s52, %s53
      %p65 = scmp.eq.s32.totalorder %s22, 1
      %p66 = por %p64, %p65
      %p68 = scmp.ne.s32.totalorder %s53, %s67
      %p69 = scmp.eq.s32.totalorder %s22, 0
      %p70 = por %p68, %p69
      %s72 = sadd.s32 %s71, 1
      %p75 = scmp.eq.s32.totalorder %s16, 1
      %p76 = scmp.ne.s32.totalorder %s71, %s73
      %p77 = scmp.eq.s32.totalorder %s16, 0
      %p78 = por %p76, %p77
      %p79 = scmp.ne.s32.totalorder %s71, %s73
      %p80 = scmp.eq.s32.totalorder %s21, 1
      %p81 = por %p79, %p80
      %p82 = scmp.ne.s32.totalorder %s73, %s74
      %p83 = scmp.eq.s32.totalorder %s21, 0
      %p84 = por %p82, %p83
      %p85 = scmp.ne.s32.totalorder %s73, %s74
      %p86 = scmp.eq.s32.totalorder %s22, 1
      %p87 = por %p85, %p86
      %p89 = scmp.ne.s32.totalorder %s74, %s88
      %p90 = scmp.eq.s32.totalorder %s22, 0
      %p91 = por %p89, %p90
      %s92 = ssub.s32 %s16, %s23
      %p93 = scmp.eq.s32.totalorder %s92, 0
      %s95 = sadd.s32 %s94, 1
      %s96 = scalar_select %p93, %s94, %s95
      %p99 = pneg %p93
      %p100 = scmp.eq.s32.totalorder %s16, 1
      %p101 = por %p99, %p100
      %p102 = scmp.ne.s32.totalorder %s94, %s97
      %p103 = scmp.eq.s32.totalorder %s16, 0
      %p104 = por %p102, %p103
      %p105 = scmp.ne.s32.totalorder %s94, %s97
      %p106 = scmp.eq.s32.totalorder %s21, 1
      %p107 = por %p105, %p106
      %p108 = scmp.ne.s32.totalorder %s97, %s98
      %p109 = scmp.eq.s32.totalorder %s21, 0
      %p110 = por %p108, %p109
      %p111 = scmp.ne.s32.totalorder %s97, %s98
      %p112 = scmp.eq.s32.totalorder %s22, 1
      %p113 = por %p111, %p112
      %p115 = scmp.ne.s32.totalorder %s98, %s114
      %p116 = scmp.eq.s32.totalorder %s22, 0
      %p117 = por %p115, %p116
      %p118 = scmp.le.s32.totalorder 1, %s16
      %p119 = scmp.lt.s32.totalorder %s16, 3
      %p120 = pnand %p118, %p119
      %p121 = pneg %p120
      // Predicated region
      $region9: #{tpu_custom_call.1} parent=5 // pred_check
        _
      $region10: #{tpu_custom_call.1} parent=5 // pred_check_branch
        %123 = sbr.rel (%p120) target = $region12
      $region11: #{tpu_custom_call.1} parent=5 // pred_region
        %s124 = ssub.s32 %s16, 1
        // Predicated region
        $region13: #{tpu_custom_call.1} parent=11 // pred_check
          %p125 = pneg %p63
        $region14: #{tpu_custom_call.1} parent=11 // pred_check_branch
          %127 = sbr.rel (%p125) target = $region16
        $region15: #{tpu_custom_call.1} parent=11 // pred_region
          %129 = vsyncadd [#allocation6], 0
          %s130 = sshll.u32 %s1, 4
          %s131 = int_to_ptr.hbm [resolvable:$true] %s130
          %s132 = sshll.u32 [#allocation5], 4
          %s133 = int_to_ptr.vmem [resolvable:$true] %s132
          %138 = dma.hbm_to_vmem [thread:$0]  %s131, 1024, %s133, [#allocation6], 64, 64, 4
        $region16: #{tpu_custom_call.1} parent=11 // pred_fallthru
          _
        // Predicated region
        $region17: #{tpu_custom_call.1} parent=11 // pred_check
          %p139 = pneg %p84
        $region18: #{tpu_custom_call.1} parent=11 // pred_check_branch
          %141 = sbr.rel (%p139) target = $region20
        $region19: #{tpu_custom_call.1} parent=11 // pred_region
          _
        $region20: #{tpu_custom_call.1} parent=11 // pred_fallthru
          _
      $region12: #{tpu_custom_call.1} parent=5 // pred_fallthru
        _
      %p142 = scmp.lt.s32.totalorder %s16, 2
      // Predicated region
      $region21: #{tpu_custom_call.1} parent=5 // pred_check
        %p143 = pneg %p142
      $region22: #{tpu_custom_call.1} parent=5 // pred_check_branch
        %145 = sbr.rel (%p143) target = $region24
      $region23: #{tpu_custom_call.1} parent=5 // pred_region
        // Predicated region
        $region25: #{tpu_custom_call.1} parent=23 // pred_check
          %p146 = pneg %p36
        $region26: #{tpu_custom_call.1} parent=23 // pred_check_branch
          %148 = sbr.rel (%p146) target = $region28
        $region27: #{tpu_custom_call.1} parent=23 // pred_region
          %s149 = sand.u32 %s26, 1
          %s150 = scalar_lea.sflag [#allocation3], %s149
          %s151 = sand.u32 %s26, 1
          %s152 = smul.addr %s151, 256
          %s153 = scalar_lea.vmem [#allocation2], %s152
          %s154 = smul.u32 64, %s16
          %156 = vsyncadd %s150, 0
          %s157 = smul.addr %s154, 4
          %s158 = scalar_lea.hbm %s0, %s157
          %s159 = sshll.u32 %s158, 4
          %s160 = int_to_ptr.hbm [resolvable:$true] %s159
          %s161 = sshll.u32 %s153, 4
          %s162 = int_to_ptr.vmem [resolvable:$true] %s161
          %167 = dma.hbm_to_vmem [thread:$0]  %s160, 4096, %s162, %s150, 64, 64, 4
        $region28: #{tpu_custom_call.1} parent=23 // pred_fallthru
          _
      $region24: #{tpu_custom_call.1} parent=5 // pred_fallthru
        _
      %p168 = scmp.le.s32.totalorder 1, %s16
      %p169 = scmp.lt.s32.totalorder %s16, 3
      %p170 = pnand %p168, %p169
      %p171 = pneg %p170
      // Predicated region
      $region29: #{tpu_custom_call.1} parent=5 // pred_check
        _
      $region30: #{tpu_custom_call.1} parent=5 // pred_check_branch
        %173 = sbr.rel (%p170) target = $region32
      $region31: #{tpu_custom_call.1} parent=5 // pred_region
        %s174 = ssub.s32 %s16, 1
        %s175 = sand.u32 %s29, 1
        %s176 = scalar_lea.sflag [#allocation3], %s175
        %s177 = sand.u32 %s29, 1
        %s178 = smul.addr %s177, 256
        %s179 = scalar_lea.vmem [#allocation2], %s178
        // Predicated region
        $region33: #{tpu_custom_call.1} parent=31 // pred_check
          %p180 = pneg %p42
        $region34: #{tpu_custom_call.1} parent=31 // pred_check_branch
          %182 = sbr.rel (%p180) target = $region36
        $region35: #{tpu_custom_call.1} parent=31 // pred_region
          %184 = dma.done %s176, 4096
        $region36: #{tpu_custom_call.1} parent=31 // pred_fallthru
          _
        // Predicated region
        $region37: #{tpu_custom_call.1} parent=31 // pred_check
          %p185 = pneg %p63
        $region38: #{tpu_custom_call.1} parent=31 // pred_check_branch
          %187 = sbr.rel (%p185) target = $region40
        $region39: #{tpu_custom_call.1} parent=31 // pred_region
          %189 = dma.done [#allocation6], 1024
        $region40: #{tpu_custom_call.1} parent=31 // pred_fallthru
          _
        %s190 = sand.u32 %s29, 1
        %s191 = scalar_lea.sflag [#allocation3], %s190
        %s192 = sand.u32 %s29, 1
        %s193 = smul.addr %s192, 256
        %s194 = scalar_lea.vmem [#allocation2], %s193
        %p195 = pneg %p42
        %p196 = pneg %p39
        %p197 = pneg %p63
        %p198 = pneg %p60
        %p199 = pneg %p84
        %p200 = pneg %p81
        %p201 = pneg %p110
        %p202 = pneg %p107
        %s203 = sand.u32 %s97, 1
        %s204 = scalar_lea.sflag [#allocation4], %s203
        %s205 = sand.u32 %s97, 1
        %s206 = smul.addr %s205, 256
        %s207 = scalar_lea.vmem [#allocation7], %s206
        %s208 = smul.u32 64, %s21
        %s209 = smul.u32 64, %s21
        %v210 = vld [vmem:[%s179] sm:$0xf]
        %v211 = vld [vmem:[%s179 + $0x4] sm:$0xf]
        %v212 = vld [vmem:[%s179 + $0x8] sm:$0xf]
        %v213 = vld [vmem:[%s179 + $0xc] sm:$0xf]
        %v214 = vld [vmem:[%s179 + $0x10] sm:$0xf]
        %v215 = vld [vmem:[%s179 + $0x14] sm:$0xf]
        %v216 = vld [vmem:[%s179 + $0x18] sm:$0xf]
        %v217 = vld [vmem:[%s179 + $0x1c] sm:$0xf]
        %v218 = vld [vmem:[%s179 + $0x20] sm:$0xf]
        %v219 = vld [vmem:[%s179 + $0x24] sm:$0xf]
        %v220 = vld [vmem:[%s179 + $0x28] sm:$0xf]
        %v221 = vld [vmem:[%s179 + $0x2c] sm:$0xf]
        %v222 = vld [vmem:[%s179 + $0x30] sm:$0xf]
        %v223 = vld [vmem:[%s179 + $0x34] sm:$0xf]
        %v224 = vld [vmem:[%s179 + $0x38] sm:$0xf]
        %v225 = vld [vmem:[%s179 + $0x3c] sm:$0xf]
        %v226 = vld [vmem:[%s179 + $0x40] sm:$0xf]
        %v227 = vld [vmem:[%s179 + $0x44] sm:$0xf]
        %v228 = vld [vmem:[%s179 + $0x48] sm:$0xf]
        %v229 = vld [vmem:[%s179 + $0x4c] sm:$0xf]
        %v230 = vld [vmem:[%s179 + $0x50] sm:$0xf]
        %v231 = vld [vmem:[%s179 + $0x54] sm:$0xf]
        %v232 = vld [vmem:[%s179 + $0x58] sm:$0xf]
        %v233 = vld [vmem:[%s179 + $0x5c] sm:$0xf]
        %v234 = vld [vmem:[%s179 + $0x60] sm:$0xf]
        %v235 = vld [vmem:[%s179 + $0x64] sm:$0xf]
        %v236 = vld [vmem:[%s179 + $0x68] sm:$0xf]
        %v237 = vld [vmem:[%s179 + $0x6c] sm:$0xf]
        %v238 = vld [vmem:[%s179 + $0x70] sm:$0xf]
        %v239 = vld [vmem:[%s179 + $0x74] sm:$0xf]
        %v240 = vld [vmem:[%s179 + $0x78] sm:$0xf]
        %v241 = vld [vmem:[%s179 + $0x7c] sm:$0xf]
        %v242 = vld [vmem:[%s179 + $0x80] sm:$0xf]
        %v243 = vld [vmem:[%s179 + $0x84] sm:$0xf]
        %v244 = vld [vmem:[%s179 + $0x88] sm:$0xf]
        %v245 = vld [vmem:[%s179 + $0x8c] sm:$0xf]
        %v246 = vld [vmem:[%s179 + $0x90] sm:$0xf]
        %v247 = vld [vmem:[%s179 + $0x94] sm:$0xf]
        %v248 = vld [vmem:[%s179 + $0x98] sm:$0xf]
        %v249 = vld [vmem:[%s179 + $0x9c] sm:$0xf]
        %v250 = vld [vmem:[%s179 + $0xa0] sm:$0xf]
        %v251 = vld [vmem:[%s179 + $0xa4] sm:$0xf]
        %v252 = vld [vmem:[%s179 + $0xa8] sm:$0xf]
        %v253 = vld [vmem:[%s179 + $0xac] sm:$0xf]
        %v254 = vld [vmem:[%s179 + $0xb0] sm:$0xf]
        %v255 = vld [vmem:[%s179 + $0xb4] sm:$0xf]
        %v256 = vld [vmem:[%s179 + $0xb8] sm:$0xf]
        %v257 = vld [vmem:[%s179 + $0xbc] sm:$0xf]
        %v258 = vld [vmem:[%s179 + $0xc0] sm:$0xf]
        %v259 = vld [vmem:[%s179 + $0xc4] sm:$0xf]
        %v260 = vld [vmem:[%s179 + $0xc8] sm:$0xf]
        %v261 = vld [vmem:[%s179 + $0xcc] sm:$0xf]
        %v262 = vld [vmem:[%s179 + $0xd0] sm:$0xf]
        %v263 = vld [vmem:[%s179 + $0xd4] sm:$0xf]
        %v264 = vld [vmem:[%s179 + $0xd8] sm:$0xf]
        %v265 = vld [vmem:[%s179 + $0xdc] sm:$0xf]
        %v266 = vld [vmem:[%s179 + $0xe0] sm:$0xf]
        %v267 = vld [vmem:[%s179 + $0xe4] sm:$0xf]
        %v268 = vld [vmem:[%s179 + $0xe8] sm:$0xf]
        %v269 = vld [vmem:[%s179 + $0xec] sm:$0xf]
        %v270 = vld [vmem:[%s179 + $0xf0] sm:$0xf]
        %v271 = vld [vmem:[%s179 + $0xf4] sm:$0xf]
        %v272 = vld [vmem:[%s179 + $0xf8] sm:$0xf]
        %v273 = vld [vmem:[%s179 + $0xfc] sm:$0xf]
        %v274 = vunpack.c.l.bf16 %v210
        %v275 = vunpack.c.l.bf16 %v211
        %v276 = vunpack.c.l.bf16 %v212
        %v277 = vunpack.c.l.bf16 %v213
        %v278 = vunpack.c.l.bf16 %v214
        %v279 = vunpack.c.l.bf16 %v215
        %v280 = vunpack.c.l.bf16 %v216
        %v281 = vunpack.c.l.bf16 %v217
        %v282 = vunpack.c.l.bf16 %v218
        %v283 = vunpack.c.l.bf16 %v219
        %v284 = vunpack.c.l.bf16 %v220
        %v285 = vunpack.c.l.bf16 %v221
        %v286 = vunpack.c.l.bf16 %v222
        %v287 = vunpack.c.l.bf16 %v223
        %v288 = vunpack.c.l.bf16 %v224
        %v289 = vunpack.c.l.bf16 %v225
        %v290 = vunpack.c.l.bf16 %v226
        %v291 = vunpack.c.l.bf16 %v227
        %v292 = vunpack.c.l.bf16 %v228
        %v293 = vunpack.c.l.bf16 %v229
        %v294 = vunpack.c.l.bf16 %v230
        %v295 = vunpack.c.l.bf16 %v231
        %v296 = vunpack.c.l.bf16 %v232
        %v297 = vunpack.c.l.bf16 %v233
        %v298 = vunpack.c.l.bf16 %v234
        %v299 = vunpack.c.l.bf16 %v235
        %v300 = vunpack.c.l.bf16 %v236
        %v301 = vunpack.c.l.bf16 %v237
        %v302 = vunpack.c.l.bf16 %v238
        %v303 = vunpack.c.l.bf16 %v239
        %v304 = vunpack.c.l.bf16 %v240
        %v305 = vunpack.c.l.bf16 %v241
        %v306 = vunpack.c.l.bf16 %v242
        %v307 = vunpack.c.l.bf16 %v243
        %v308 = vunpack.c.l.bf16 %v244
        %v309 = vunpack.c.l.bf16 %v245
        %v310 = vunpack.c.l.bf16 %v246
        %v311 = vunpack.c.l.bf16 %v247
        %v312 = vunpack.c.l.bf16 %v248
        %v313 = vunpack.c.l.bf16 %v249
        %v314 = vunpack.c.l.bf16 %v250
        %v315 = vunpack.c.l.bf16 %v251
        %v316 = vunpack.c.l.bf16 %v252
        %v317 = vunpack.c.l.bf16 %v253
        %v318 = vunpack.c.l.bf16 %v254
        %v319 = vunpack.c.l.bf16 %v255
        %v320 = vunpack.c.l.bf16 %v256
        %v321 = vunpack.c.l.bf16 %v257
        %v322 = vunpack.c.l.bf16 %v258
        %v323 = vunpack.c.l.bf16 %v259
        %v324 = vunpack.c.l.bf16 %v260
        %v325 = vunpack.c.l.bf16 %v261
        %v326 = vunpack.c.l.bf16 %v262
        %v327 = vunpack.c.l.bf16 %v263
        %v328 = vunpack.c.l.bf16 %v264
        %v329 = vunpack.c.l.bf16 %v265
        %v330 = vunpack.c.l.bf16 %v266
        %v331 = vunpack.c.l.bf16 %v267
        %v332 = vunpack.c.l.bf16 %v268
        %v333 = vunpack.c.l.bf16 %v269
        %v334 = vunpack.c.l.bf16 %v270
        %v335 = vunpack.c.l.bf16 %v271
        %v336 = vunpack.c.l.bf16 %v272
        %v337 = vunpack.c.l.bf16 %v273
        %338 = vadd.xlane.f32.xlu0 %v274
        %v339 = vpop.xlane.xlu0 %338
        %340 = vadd.xlane.f32.xlu0 %v275
        %v341 = vpop.xlane.xlu0 %340
        %342 = vadd.xlane.f32.xlu0 %v276
        %v343 = vpop.xlane.xlu0 %342
        %344 = vadd.xlane.f32.xlu0 %v277
        %v345 = vpop.xlane.xlu0 %344
        %346 = vadd.xlane.f32.xlu0 %v278
        %v347 = vpop.xlane.xlu0 %346
        %348 = vadd.xlane.f32.xlu0 %v279
        %v349 = vpop.xlane.xlu0 %348
        %350 = vadd.xlane.f32.xlu0 %v280
        %v351 = vpop.xlane.xlu0 %350
        %352 = vadd.xlane.f32.xlu0 %v281
        %v353 = vpop.xlane.xlu0 %352
        %354 = vadd.xlane.f32.xlu0 %v282
        %v355 = vpop.xlane.xlu0 %354
        %356 = vadd.xlane.f32.xlu0 %v283
        %v357 = vpop.xlane.xlu0 %356
        %358 = vadd.xlane.f32.xlu0 %v284
        %v359 = vpop.xlane.xlu0 %358
        %360 = vadd.xlane.f32.xlu0 %v285
        %v361 = vpop.xlane.xlu0 %360
        %362 = vadd.xlane.f32.xlu0 %v286
        %v363 = vpop.xlane.xlu0 %362
        %364 = vadd.xlane.f32.xlu0 %v287
        %v365 = vpop.xlane.xlu0 %364
        %366 = vadd.xlane.f32.xlu0 %v288
        %v367 = vpop.xlane.xlu0 %366
        %368 = vadd.xlane.f32.xlu0 %v289
        %v369 = vpop.xlane.xlu0 %368
        %370 = vadd.xlane.f32.xlu0 %v290
        %v371 = vpop.xlane.xlu0 %370
        %372 = vadd.xlane.f32.xlu0 %v291
        %v373 = vpop.xlane.xlu0 %372
        %374 = vadd.xlane.f32.xlu0 %v292
        %v375 = vpop.xlane.xlu0 %374
        %376 = vadd.xlane.f32.xlu0 %v293
        %v377 = vpop.xlane.xlu0 %376
        %378 = vadd.xlane.f32.xlu0 %v294
        %v379 = vpop.xlane.xlu0 %378
        %380 = vadd.xlane.f32.xlu0 %v295
        %v381 = vpop.xlane.xlu0 %380
        %382 = vadd.xlane.f32.xlu0 %v296
        %v383 = vpop.xlane.xlu0 %382
        %384 = vadd.xlane.f32.xlu0 %v297
        %v385 = vpop.xlane.xlu0 %384
        %386 = vadd.xlane.f32.xlu0 %v298
        %v387 = vpop.xlane.xlu0 %386
        %388 = vadd.xlane.f32.xlu0 %v299
        %v389 = vpop.xlane.xlu0 %388
        %390 = vadd.xlane.f32.xlu0 %v300
        %v391 = vpop.xlane.xlu0 %390
        %392 = vadd.xlane.f32.xlu0 %v301
        %v393 = vpop.xlane.xlu0 %392
        %394 = vadd.xlane.f32.xlu0 %v302
        %v395 = vpop.xlane.xlu0 %394
        %396 = vadd.xlane.f32.xlu0 %v303
        %v397 = vpop.xlane.xlu0 %396
        %398 = vadd.xlane.f32.xlu0 %v304
        %v399 = vpop.xlane.xlu0 %398
        %400 = vadd.xlane.f32.xlu0 %v305
        %v401 = vpop.xlane.xlu0 %400
        %402 = vadd.xlane.f32.xlu0 %v306
        %v403 = vpop.xlane.xlu0 %402
        %404 = vadd.xlane.f32.xlu0 %v307
        %v405 = vpop.xlane.xlu0 %404
        %406 = vadd.xlane.f32.xlu0 %v308
        %v407 = vpop.xlane.xlu0 %406
        %408 = vadd.xlane.f32.xlu0 %v309
        %v409 = vpop.xlane.xlu0 %408
        %410 = vadd.xlane.f32.xlu0 %v310
        %v411 = vpop.xlane.xlu0 %410
        %412 = vadd.xlane.f32.xlu0 %v311
        %v413 = vpop.xlane.xlu0 %412
        %414 = vadd.xlane.f32.xlu0 %v312
        %v415 = vpop.xlane.xlu0 %414
        %416 = vadd.xlane.f32.xlu0 %v313
        %v417 = vpop.xlane.xlu0 %416
        %418 = vadd.xlane.f32.xlu0 %v314
        %v419 = vpop.xlane.xlu0 %418
        %420 = vadd.xlane.f32.xlu0 %v315
        %v421 = vpop.xlane.xlu0 %420
        %422 = vadd.xlane.f32.xlu0 %v316
        %v423 = vpop.xlane.xlu0 %422
        %424 = vadd.xlane.f32.xlu0 %v317
        %v425 = vpop.xlane.xlu0 %424
        %426 = vadd.xlane.f32.xlu0 %v318
        %v427 = vpop.xlane.xlu0 %426
        %428 = vadd.xlane.f32.xlu0 %v319
        %v429 = vpop.xlane.xlu0 %428
        %430 = vadd.xlane.f32.xlu0 %v320
        %v431 = vpop.xlane.xlu0 %430
        %432 = vadd.xlane.f32.xlu0 %v321
        %v433 = vpop.xlane.xlu0 %432
        %434 = vadd.xlane.f32.xlu0 %v322
        %v435 = vpop.xlane.xlu0 %434
        %436 = vadd.xlane.f32.xlu0 %v323
        %v437 = vpop.xlane.xlu0 %436
        %438 = vadd.xlane.f32.xlu0 %v324
        %v439 = vpop.xlane.xlu0 %438
        %440 = vadd.xlane.f32.xlu0 %v325
        %v441 = vpop.xlane.xlu0 %440
        %442 = vadd.xlane.f32.xlu0 %v326
        %v443 = vpop.xlane.xlu0 %442
        %444 = vadd.xlane.f32.xlu0 %v327
        %v445 = vpop.xlane.xlu0 %444
        %446 = vadd.xlane.f32.xlu0 %v328
        %v447 = vpop.xlane.xlu0 %446
        %448 = vadd.xlane.f32.xlu0 %v329
        %v449 = vpop.xlane.xlu0 %448
        %450 = vadd.xlane.f32.xlu0 %v330
        %v451 = vpop.xlane.xlu0 %450
        %452 = vadd.xlane.f32.xlu0 %v331
        %v453 = vpop.xlane.xlu0 %452
        %454 = vadd.xlane.f32.xlu0 %v332
        %v455 = vpop.xlane.xlu0 %454
        %456 = vadd.xlane.f32.xlu0 %v333
        %v457 = vpop.xlane.xlu0 %456
        %458 = vadd.xlane.f32.xlu0 %v334
        %v459 = vpop.xlane.xlu0 %458
        %460 = vadd.xlane.f32.xlu0 %v335
        %v461 = vpop.xlane.xlu0 %460
        %462 = vadd.xlane.f32.xlu0 %v336
        %v463 = vpop.xlane.xlu0 %462
        %464 = vadd.xlane.f32.xlu0 %v337
        %v465 = vpop.xlane.xlu0 %464
        %v466 = vrcp.pop 128.0
        %v467 = vmul.f32 128.0, %v466
        %v468 = vsub.f32 1.0, %v467
        %v469 = vmul.f32 %v466, %v468
        %v470 = vadd.f32 %v466, %v469
        %vm471 = vweird.f32 %v466
        %v472 = vsel %vm471, %v466, %v470
        %v473 = vmul.f32 %v339, %v472
        %v474 = vmul.f32 %v341, %v472
        %v475 = vmul.f32 %v343, %v472
        %v476 = vmul.f32 %v345, %v472
        %v477 = vmul.f32 %v347, %v472
        %v478 = vmul.f32 %v349, %v472
        %v479 = vmul.f32 %v351, %v472
        %v480 = vmul.f32 %v353, %v472
        %v481 = vmul.f32 %v355, %v472
        %v482 = vmul.f32 %v357, %v472
        %v483 = vmul.f32 %v359, %v472
        %v484 = vmul.f32 %v361, %v472
        %v485 = vmul.f32 %v363, %v472
        %v486 = vmul.f32 %v365, %v472
        %v487 = vmul.f32 %v367, %v472
        %v488 = vmul.f32 %v369, %v472
        %v489 = vmul.f32 %v371, %v472
        %v490 = vmul.f32 %v373, %v472
        %v491 = vmul.f32 %v375, %v472
        %v492 = vmul.f32 %v377, %v472
        %v493 = vmul.f32 %v379, %v472
        %v494 = vmul.f32 %v381, %v472
        %v495 = vmul.f32 %v383, %v472
        %v496 = vmul.f32 %v385, %v472
        %v497 = vmul.f32 %v387, %v472
        %v498 = vmul.f32 %v389, %v472
        %v499 = vmul.f32 %v391, %v472
        %v500 = vmul.f32 %v393, %v472
        %v501 = vmul.f32 %v395, %v472
        %v502 = vmul.f32 %v397, %v472
        %v503 = vmul.f32 %v399, %v472
        %v504 = vmul.f32 %v401, %v472
        %v505 = vmul.f32 %v403, %v472
        %v506 = vmul.f32 %v405, %v472
        %v507 = vmul.f32 %v407, %v472
        %v508 = vmul.f32 %v409, %v472
        %v509 = vmul.f32 %v411, %v472
        %v510 = vmul.f32 %v413, %v472
        %v511 = vmul.f32 %v415, %v472
        %v512 = vmul.f32 %v417, %v472
        %v513 = vmul.f32 %v419, %v472
        %v514 = vmul.f32 %v421, %v472
        %v515 = vmul.f32 %v423, %v472
        %v516 = vmul.f32 %v425, %v472
        %v517 = vmul.f32 %v427, %v472
        %v518 = vmul.f32 %v429, %v472
        %v519 = vmul.f32 %v431, %v472
        %v520 = vmul.f32 %v433, %v472
        %v521 = vmul.f32 %v435, %v472
        %v522 = vmul.f32 %v437, %v472
        %v523 = vmul.f32 %v439, %v472
        %v524 = vmul.f32 %v441, %v472
        %v525 = vmul.f32 %v443, %v472
        %v526 = vmul.f32 %v445, %v472
        %v527 = vmul.f32 %v447, %v472
        %v528 = vmul.f32 %v449, %v472
        %v529 = vmul.f32 %v451, %v472
        %v530 = vmul.f32 %v453, %v472
        %v531 = vmul.f32 %v455, %v472
        %v532 = vmul.f32 %v457, %v472
        %v533 = vmul.f32 %v459, %v472
        %v534 = vmul.f32 %v461, %v472
        %v535 = vmul.f32 %v463, %v472
        %v536 = vmul.f32 %v465, %v472
        %v537 = vsub.f32 %v274, %v473
        %v538 = vsub.f32 %v275, %v474
        %v539 = vsub.f32 %v276, %v475
        %v540 = vsub.f32 %v277, %v476
        %v541 = vsub.f32 %v278, %v477
        %v542 = vsub.f32 %v279, %v478
        %v543 = vsub.f32 %v280, %v479
        %v544 = vsub.f32 %v281, %v480
        %v545 = vsub.f32 %v282, %v481
        %v546 = vsub.f32 %v283, %v482
        %v547 = vsub.f32 %v284, %v483
        %v548 = vsub.f32 %v285, %v484
        %v549 = vsub.f32 %v286, %v485
        %v550 = vsub.f32 %v287, %v486
        %v551 = vsub.f32 %v288, %v487
        %v552 = vsub.f32 %v289, %v488
        %v553 = vsub.f32 %v290, %v489
        %v554 = vsub.f32 %v291, %v490
        %v555 = vsub.f32 %v292, %v491
        %v556 = vsub.f32 %v293, %v492
        %v557 = vsub.f32 %v294, %v493
        %v558 = vsub.f32 %v295, %v494
        %v559 = vsub.f32 %v296, %v495
        %v560 = vsub.f32 %v297, %v496
        %v561 = vsub.f32 %v298, %v497
        %v562 = vsub.f32 %v299, %v498
        %v563 = vsub.f32 %v300, %v499
        %v564 = vsub.f32 %v301, %v500
        %v565 = vsub.f32 %v302, %v501
        %v566 = vsub.f32 %v303, %v502
        %v567 = vsub.f32 %v304, %v503
        %v568 = vsub.f32 %v305, %v504
        %v569 = vsub.f32 %v306, %v505
        %v570 = vsub.f32 %v307, %v506
        %v571 = vsub.f32 %v308, %v507
        %v572 = vsub.f32 %v309, %v508
        %v573 = vsub.f32 %v310, %v509
        %v574 = vsub.f32 %v311, %v510
        %v575 = vsub.f32 %v312, %v511
        %v576 = vsub.f32 %v313, %v512
        %v577 = vsub.f32 %v314, %v513
        %v578 = vsub.f32 %v315, %v514
        %v579 = vsub.f32 %v316, %v515
        %v580 = vsub.f32 %v317, %v516
        %v581 = vsub.f32 %v318, %v517
        %v582 = vsub.f32 %v319, %v518
        %v583 = vsub.f32 %v320, %v519
        %v584 = vsub.f32 %v321, %v520
        %v585 = vsub.f32 %v322, %v521
        %v586 = vsub.f32 %v323, %v522
        %v587 = vsub.f32 %v324, %v523
        %v588 = vsub.f32 %v325, %v524
        %v589 = vsub.f32 %v326, %v525
        %v590 = vsub.f32 %v327, %v526
        %v591 = vsub.f32 %v328, %v527
        %v592 = vsub.f32 %v329, %v528
        %v593 = vsub.f32 %v330, %v529
        %v594 = vsub.f32 %v331, %v530
        %v595 = vsub.f32 %v332, %v531
        %v596 = vsub.f32 %v333, %v532
        %v597 = vsub.f32 %v334, %v533
        %v598 = vsub.f32 %v335, %v534
        %v599 = vsub.f32 %v336, %v535
        %v600 = vsub.f32 %v337, %v536
        %v601 = vmul.f32 %v537, %v537
        %v602 = vmul.f32 %v538, %v538
        %v603 = vmul.f32 %v539, %v539
        %v604 = vmul.f32 %v540, %v540
        %v605 = vmul.f32 %v541, %v541
        %v606 = vmul.f32 %v542, %v542
        %v607 = vmul.f32 %v543, %v543
        %v608 = vmul.f32 %v544, %v544
        %v609 = vmul.f32 %v545, %v545
        %v610 = vmul.f32 %v546, %v546
        %v611 = vmul.f32 %v547, %v547
        %v612 = vmul.f32 %v548, %v548
        %v613 = vmul.f32 %v549, %v549
        %v614 = vmul.f32 %v550, %v550
        %v615 = vmul.f32 %v551, %v551
        %v616 = vmul.f32 %v552, %v552
        %v617 = vmul.f32 %v553, %v553
        %v618 = vmul.f32 %v554, %v554
        %v619 = vmul.f32 %v555, %v555
        %v620 = vmul.f32 %v556, %v556
        %v621 = vmul.f32 %v557, %v557
        %v622 = vmul.f32 %v558, %v558
        %v623 = vmul.f32 %v559, %v559
        %v624 = vmul.f32 %v560, %v560
        %v625 = vmul.f32 %v561, %v561
        %v626 = vmul.f32 %v562, %v562
        %v627 = vmul.f32 %v563, %v563
        %v628 = vmul.f32 %v564, %v564
        %v629 = vmul.f32 %v565, %v565
        %v630 = vmul.f32 %v566, %v566
        %v631 = vmul.f32 %v567, %v567
        %v632 = vmul.f32 %v568, %v568
        %v633 = vmul.f32 %v569, %v569
        %v634 = vmul.f32 %v570, %v570
        %v635 = vmul.f32 %v571, %v571
        %v636 = vmul.f32 %v572, %v572
        %v637 = vmul.f32 %v573, %v573
        %v638 = vmul.f32 %v574, %v574
        %v639 = vmul.f32 %v575, %v575
        %v640 = vmul.f32 %v576, %v576
        %v641 = vmul.f32 %v577, %v577
        %v642 = vmul.f32 %v578, %v578
        %v643 = vmul.f32 %v579, %v579
        %v644 = vmul.f32 %v580, %v580
        %v645 = vmul.f32 %v581, %v581
        %v646 = vmul.f32 %v582, %v582
        %v647 = vmul.f32 %v583, %v583
        %v648 = vmul.f32 %v584, %v584
        %v649 = vmul.f32 %v585, %v585
        %v650 = vmul.f32 %v586, %v586
        %v651 = vmul.f32 %v587, %v587
        %v652 = vmul.f32 %v588, %v588
        %v653 = vmul.f32 %v589, %v589
        %v654 = vmul.f32 %v590, %v590
        %v655 = vmul.f32 %v591, %v591
        %v656 = vmul.f32 %v592, %v592
        %v657 = vmul.f32 %v593, %v593
        %v658 = vmul.f32 %v594, %v594
        %v659 = vmul.f32 %v595, %v595
        %v660 = vmul.f32 %v596, %v596
        %v661 = vmul.f32 %v597, %v597
        %v662 = vmul.f32 %v598, %v598
        %v663 = vmul.f32 %v599, %v599
        %v664 = vmul.f32 %v600, %v600
        %665 = vadd.xlane.f32.xlu0 %v601
        %v666 = vpop.xlane.xlu0 %665
        %667 = vadd.xlane.f32.xlu0 %v602
        %v668 = vpop.xlane.xlu0 %667
        %669 = vadd.xlane.f32.xlu0 %v603
        %v670 = vpop.xlane.xlu0 %669
        %671 = vadd.xlane.f32.xlu0 %v604
        %v672 = vpop.xlane.xlu0 %671
        %673 = vadd.xlane.f32.xlu0 %v605
        %v674 = vpop.xlane.xlu0 %673
        %675 = vadd.xlane.f32.xlu0 %v606
        %v676 = vpop.xlane.xlu0 %675
        %677 = vadd.xlane.f32.xlu0 %v607
        %v678 = vpop.xlane.xlu0 %677
        %679 = vadd.xlane.f32.xlu0 %v608
        %v680 = vpop.xlane.xlu0 %679
        %681 = vadd.xlane.f32.xlu0 %v609
        %v682 = vpop.xlane.xlu0 %681
        %683 = vadd.xlane.f32.xlu0 %v610
        %v684 = vpop.xlane.xlu0 %683
        %685 = vadd.xlane.f32.xlu0 %v611
        %v686 = vpop.xlane.xlu0 %685
        %687 = vadd.xlane.f32.xlu0 %v612
        %v688 = vpop.xlane.xlu0 %687
        %689 = vadd.xlane.f32.xlu0 %v613
        %v690 = vpop.xlane.xlu0 %689
        %691 = vadd.xlane.f32.xlu0 %v614
        %v692 = vpop.xlane.xlu0 %691
        %693 = vadd.xlane.f32.xlu0 %v615
        %v694 = vpop.xlane.xlu0 %693
        %695 = vadd.xlane.f32.xlu0 %v616
        %v696 = vpop.xlane.xlu0 %695
        %697 = vadd.xlane.f32.xlu0 %v617
        %v698 = vpop.xlane.xlu0 %697
        %699 = vadd.xlane.f32.xlu0 %v618
        %v700 = vpop.xlane.xlu0 %699
        %701 = vadd.xlane.f32.xlu0 %v619
        %v702 = vpop.xlane.xlu0 %701
        %703 = vadd.xlane.f32.xlu0 %v620
        %v704 = vpop.xlane.xlu0 %703
        %705 = vadd.xlane.f32.xlu0 %v621
        %v706 = vpop.xlane.xlu0 %705
        %707 = vadd.xlane.f32.xlu0 %v622
        %v708 = vpop.xlane.xlu0 %707
        %709 = vadd.xlane.f32.xlu0 %v623
        %v710 = vpop.xlane.xlu0 %709
        %711 = vadd.xlane.f32.xlu0 %v624
        %v712 = vpop.xlane.xlu0 %711
        %713 = vadd.xlane.f32.xlu0 %v625
        %v714 = vpop.xlane.xlu0 %713
        %715 = vadd.xlane.f32.xlu0 %v626
        %v716 = vpop.xlane.xlu0 %715
        %717 = vadd.xlane.f32.xlu0 %v627
        %v718 = vpop.xlane.xlu0 %717
        %719 = vadd.xlane.f32.xlu0 %v628
        %v720 = vpop.xlane.xlu0 %719
        %721 = vadd.xlane.f32.xlu0 %v629
        %v722 = vpop.xlane.xlu0 %721
        %723 = vadd.xlane.f32.xlu0 %v630
        %v724 = vpop.xlane.xlu0 %723
        %725 = vadd.xlane.f32.xlu0 %v631
        %v726 = vpop.xlane.xlu0 %725
        %727 = vadd.xlane.f32.xlu0 %v632
        %v728 = vpop.xlane.xlu0 %727
        %729 = vadd.xlane.f32.xlu0 %v633
        %v730 = vpop.xlane.xlu0 %729
        %731 = vadd.xlane.f32.xlu0 %v634
        %v732 = vpop.xlane.xlu0 %731
        %733 = vadd.xlane.f32.xlu0 %v635
        %v734 = vpop.xlane.xlu0 %733
        %735 = vadd.xlane.f32.xlu0 %v636
        %v736 = vpop.xlane.xlu0 %735
        %737 = vadd.xlane.f32.xlu0 %v637
        %v738 = vpop.xlane.xlu0 %737
        %739 = vadd.xlane.f32.xlu0 %v638
        %v740 = vpop.xlane.xlu0 %739
        %741 = vadd.xlane.f32.xlu0 %v639
        %v742 = vpop.xlane.xlu0 %741
        %743 = vadd.xlane.f32.xlu0 %v640
        %v744 = vpop.xlane.xlu0 %743
        %745 = vadd.xlane.f32.xlu0 %v641
        %v746 = vpop.xlane.xlu0 %745
        %747 = vadd.xlane.f32.xlu0 %v642
        %v748 = vpop.xlane.xlu0 %747
        %749 = vadd.xlane.f32.xlu0 %v643
        %v750 = vpop.xlane.xlu0 %749
        %751 = vadd.xlane.f32.xlu0 %v644
        %v752 = vpop.xlane.xlu0 %751
        %753 = vadd.xlane.f32.xlu0 %v645
        %v754 = vpop.xlane.xlu0 %753
        %755 = vadd.xlane.f32.xlu0 %v646
        %v756 = vpop.xlane.xlu0 %755
        %757 = vadd.xlane.f32.xlu0 %v647
        %v758 = vpop.xlane.xlu0 %757
        %759 = vadd.xlane.f32.xlu0 %v648
        %v760 = vpop.xlane.xlu0 %759
        %761 = vadd.xlane.f32.xlu0 %v649
        %v762 = vpop.xlane.xlu0 %761
        %763 = vadd.xlane.f32.xlu0 %v650
        %v764 = vpop.xlane.xlu0 %763
        %765 = vadd.xlane.f32.xlu0 %v651
        %v766 = vpop.xlane.xlu0 %765
        %767 = vadd.xlane.f32.xlu0 %v652
        %v768 = vpop.xlane.xlu0 %767
        %769 = vadd.xlane.f32.xlu0 %v653
        %v770 = vpop.xlane.xlu0 %769
        %771 = vadd.xlane.f32.xlu0 %v654
        %v772 = vpop.xlane.xlu0 %771
        %773 = vadd.xlane.f32.xlu0 %v655
        %v774 = vpop.xlane.xlu0 %773
        %775 = vadd.xlane.f32.xlu0 %v656
        %v776 = vpop.xlane.xlu0 %775
        %777 = vadd.xlane.f32.xlu0 %v657
        %v778 = vpop.xlane.xlu0 %777
        %779 = vadd.xlane.f32.xlu0 %v658
        %v780 = vpop.xlane.xlu0 %779
        %781 = vadd.xlane.f32.xlu0 %v659
        %v782 = vpop.xlane.xlu0 %781
        %783 = vadd.xlane.f32.xlu0 %v660
        %v784 = vpop.xlane.xlu0 %783
        %785 = vadd.xlane.f32.xlu0 %v661
        %v786 = vpop.xlane.xlu0 %785
        %787 = vadd.xlane.f32.xlu0 %v662
        %v788 = vpop.xlane.xlu0 %787
        %789 = vadd.xlane.f32.xlu0 %v663
        %v790 = vpop.xlane.xlu0 %789
        %791 = vadd.xlane.f32.xlu0 %v664
        %v792 = vpop.xlane.xlu0 %791
        %v793 = vmul.f32 %v666, %v472
        %v794 = vmul.f32 %v668, %v472
        %v795 = vmul.f32 %v670, %v472
        %v796 = vmul.f32 %v672, %v472
        %v797 = vmul.f32 %v674, %v472
        %v798 = vmul.f32 %v676, %v472
        %v799 = vmul.f32 %v678, %v472
        %v800 = vmul.f32 %v680, %v472
        %v801 = vmul.f32 %v682, %v472
        %v802 = vmul.f32 %v684, %v472
        %v803 = vmul.f32 %v686, %v472
        %v804 = vmul.f32 %v688, %v472
        %v805 = vmul.f32 %v690, %v472
        %v806 = vmul.f32 %v692, %v472
        %v807 = vmul.f32 %v694, %v472
        %v808 = vmul.f32 %v696, %v472
        %v809 = vmul.f32 %v698, %v472
        %v810 = vmul.f32 %v700, %v472
        %v811 = vmul.f32 %v702, %v472
        %v812 = vmul.f32 %v704, %v472
        %v813 = vmul.f32 %v706, %v472
        %v814 = vmul.f32 %v708, %v472
        %v815 = vmul.f32 %v710, %v472
        %v816 = vmul.f32 %v712, %v472
        %v817 = vmul.f32 %v714, %v472
        %v818 = vmul.f32 %v716, %v472
        %v819 = vmul.f32 %v718, %v472
        %v820 = vmul.f32 %v720, %v472
        %v821 = vmul.f32 %v722, %v472
        %v822 = vmul.f32 %v724, %v472
        %v823 = vmul.f32 %v726, %v472
        %v824 = vmul.f32 %v728, %v472
        %v825 = vmul.f32 %v730, %v472
        %v826 = vmul.f32 %v732, %v472
        %v827 = vmul.f32 %v734, %v472
        %v828 = vmul.f32 %v736, %v472
        %v829 = vmul.f32 %v738, %v472
        %v830 = vmul.f32 %v740, %v472
        %v831 = vmul.f32 %v742, %v472
        %v832 = vmul.f32 %v744, %v472
        %v833 = vmul.f32 %v746, %v472
        %v834 = vmul.f32 %v748, %v472
        %v835 = vmul.f32 %v750, %v472
        %v836 = vmul.f32 %v752, %v472
        %v837 = vmul.f32 %v754, %v472
        %v838 = vmul.f32 %v756, %v472
        %v839 = vmul.f32 %v758, %v472
        %v840 = vmul.f32 %v760, %v472
        %v841 = vmul.f32 %v762, %v472
        %v842 = vmul.f32 %v764, %v472
        %v843 = vmul.f32 %v766, %v472
        %v844 = vmul.f32 %v768, %v472
        %v845 = vmul.f32 %v770, %v472
        %v846 = vmul.f32 %v772, %v472
        %v847 = vmul.f32 %v774, %v472
        %v848 = vmul.f32 %v776, %v472
        %v849 = vmul.f32 %v778, %v472
        %v850 = vmul.f32 %v780, %v472
        %v851 = vmul.f32 %v782, %v472
        %v852 = vmul.f32 %v784, %v472
        %v853 = vmul.f32 %v786, %v472
        %v854 = vmul.f32 %v788, %v472
        %v855 = vmul.f32 %v790, %v472
        %v856 = vmul.f32 %v792, %v472
        %v857 = vadd.f32 %v793, 1e-05
        %v858 = vadd.f32 %v794, 1e-05
        %v859 = vadd.f32 %v795, 1e-05
        %v860 = vadd.f32 %v796, 1e-05
        %v861 = vadd.f32 %v797, 1e-05
        %v862 = vadd.f32 %v798, 1e-05
        %v863 = vadd.f32 %v799, 1e-05
        %v864 = vadd.f32 %v800, 1e-05
        %v865 = vadd.f32 %v801, 1e-05
        %v866 = vadd.f32 %v802, 1e-05
        %v867 = vadd.f32 %v803, 1e-05
        %v868 = vadd.f32 %v804, 1e-05
        %v869 = vadd.f32 %v805, 1e-05
        %v870 = vadd.f32 %v806, 1e-05
        %v871 = vadd.f32 %v807, 1e-05
        %v872 = vadd.f32 %v808, 1e-05
        %v873 = vadd.f32 %v809, 1e-05
        %v874 = vadd.f32 %v810, 1e-05
        %v875 = vadd.f32 %v811, 1e-05
        %v876 = vadd.f32 %v812, 1e-05
        %v877 = vadd.f32 %v813, 1e-05
        %v878 = vadd.f32 %v814, 1e-05
        %v879 = vadd.f32 %v815, 1e-05
        %v880 = vadd.f32 %v816, 1e-05
        %v881 = vadd.f32 %v817, 1e-05
        %v882 = vadd.f32 %v818, 1e-05
        %v883 = vadd.f32 %v819, 1e-05
        %v884 = vadd.f32 %v820, 1e-05
        %v885 = vadd.f32 %v821, 1e-05
        %v886 = vadd.f32 %v822, 1e-05
        %v887 = vadd.f32 %v823, 1e-05
        %v888 = vadd.f32 %v824, 1e-05
        %v889 = vadd.f32 %v825, 1e-05
        %v890 = vadd.f32 %v826, 1e-05
        %v891 = vadd.f32 %v827, 1e-05
        %v892 = vadd.f32 %v828, 1e-05
        %v893 = vadd.f32 %v829, 1e-05
        %v894 = vadd.f32 %v830, 1e-05
        %v895 = vadd.f32 %v831, 1e-05
        %v896 = vadd.f32 %v832, 1e-05
        %v897 = vadd.f32 %v833, 1e-05
        %v898 = vadd.f32 %v834, 1e-05
        %v899 = vadd.f32 %v835, 1e-05
        %v900 = vadd.f32 %v836, 1e-05
        %v901 = vadd.f32 %v837, 1e-05
        %v902 = vadd.f32 %v838, 1e-05
        %v903 = vadd.f32 %v839, 1e-05
        %v904 = vadd.f32 %v840, 1e-05
        %v905 = vadd.f32 %v841, 1e-05
        %v906 = vadd.f32 %v842, 1e-05
        %v907 = vadd.f32 %v843, 1e-05
        %v908 = vadd.f32 %v844, 1e-05
        %v909 = vadd.f32 %v845, 1e-05
        %v910 = vadd.f32 %v846, 1e-05
        %v911 = vadd.f32 %v847, 1e-05
        %v912 = vadd.f32 %v848, 1e-05
        %v913 = vadd.f32 %v849, 1e-05
        %v914 = vadd.f32 %v850, 1e-05
        %v915 = vadd.f32 %v851, 1e-05
        %v916 = vadd.f32 %v852, 1e-05
        %v917 = vadd.f32 %v853, 1e-05
        %v918 = vadd.f32 %v854, 1e-05
        %v919 = vadd.f32 %v855, 1e-05
        %v920 = vadd.f32 %v856, 1e-05
        %v921 = vrsqrt.pop %v857
        %v922 = vmul.f32 %v921, %v857
        %v923 = vmul.f32 %v922, %v921
        %v924 = vmul.f32 0.5, %v923
        %v925 = vsub.f32 1.5, %v924
        %v926 = vmul.f32 %v921, %v925
        %vm927 = vweird.f32 %v857
        %vm928 = vweird.f32 %v921
        %vm929 = vmor %vm927, %vm928
        %v930 = vsel %vm929, %v921, %v926
        %v931 = vrsqrt.pop %v858
        %v932 = vmul.f32 %v931, %v858
        %v933 = vmul.f32 %v932, %v931
        %v934 = vmul.f32 0.5, %v933
        %v935 = vsub.f32 1.5, %v934
        %v936 = vmul.f32 %v931, %v935
        %vm937 = vweird.f32 %v858
        %vm938 = vweird.f32 %v931
        %vm939 = vmor %vm937, %vm938
        %v940 = vsel %vm939, %v931, %v936
        %v941 = vrsqrt.pop %v859
        %v942 = vmul.f32 %v941, %v859
        %v943 = vmul.f32 %v942, %v941
        %v944 = vmul.f32 0.5, %v943
        %v945 = vsub.f32 1.5, %v944
        %v946 = vmul.f32 %v941, %v945
        %vm947 = vweird.f32 %v859
        %vm948 = vweird.f32 %v941
        %vm949 = vmor %vm947, %vm948
        %v950 = vsel %vm949, %v941, %v946
        %v951 = vrsqrt.pop %v860
        %v952 = vmul.f32 %v951, %v860
        %v953 = vmul.f32 %v952, %v951
        %v954 = vmul.f32 0.5, %v953
        %v955 = vsub.f32 1.5, %v954
        %v956 = vmul.f32 %v951, %v955
        %vm957 = vweird.f32 %v860
        %vm958 = vweird.f32 %v951
        %vm959 = vmor %vm957, %vm958
        %v960 = vsel %vm959, %v951, %v956
        %v961 = vrsqrt.pop %v861
        %v962 = vmul.f32 %v961, %v861
        %v963 = vmul.f32 %v962, %v961
        %v964 = vmul.f32 0.5, %v963
        %v965 = vsub.f32 1.5, %v964
        %v966 = vmul.f32 %v961, %v965
        %vm967 = vweird.f32 %v861
        %vm968 = vweird.f32 %v961
        %vm969 = vmor %vm967, %vm968
        %v970 = vsel %vm969, %v961, %v966
        %v971 = vrsqrt.pop %v862
        %v972 = vmul.f32 %v971, %v862
        %v973 = vmul.f32 %v972, %v971
        %v974 = vmul.f32 0.5, %v973
        %v975 = vsub.f32 1.5, %v974
        %v976 = vmul.f32 %v971, %v975
        %vm977 = vweird.f32 %v862
        %vm978 = vweird.f32 %v971
        %vm979 = vmor %vm977, %vm978
        %v980 = vsel %vm979, %v971, %v976
        %v981 = vrsqrt.pop %v863
        %v982 = vmul.f32 %v981, %v863
        %v983 = vmul.f32 %v982, %v981
        %v984 = vmul.f32 0.5, %v983
        %v985 = vsub.f32 1.5, %v984
        %v986 = vmul.f32 %v981, %v985
        %vm987 = vweird.f32 %v863
        %vm988 = vweird.f32 %v981
        %vm989 = vmor %vm987, %vm988
        %v990 = vsel %vm989, %v981, %v986
        %v991 = vrsqrt.pop %v864
        %v992 = vmul.f32 %v991, %v864
        %v993 = vmul.f32 %v992, %v991
        %v994 = vmul.f32 0.5, %v993
        %v995 = vsub.f32 1.5, %v994
        %v996 = vmul.f32 %v991, %v995
        %vm997 = vweird.f32 %v864
        %vm998 = vweird.f32 %v991
        %vm999 = vmor %vm997, %vm998
        %v1000 = vsel %vm999, %v991, %v996
        %v1001 = vrsqrt.pop %v865
        %v1002 = vmul.f32 %v1001, %v865
        %v1003 = vmul.f32 %v1002, %v1001
        %v1004 = vmul.f32 0.5, %v1003
        %v1005 = vsub.f32 1.5, %v1004
        %v1006 = vmul.f32 %v1001, %v1005
        %vm1007 = vweird.f32 %v865
        %vm1008 = vweird.f32 %v1001
        %vm1009 = vmor %vm1007, %vm1008
        %v1010 = vsel %vm1009, %v1001, %v1006
        %v1011 = vrsqrt.pop %v866
        %v1012 = vmul.f32 %v1011, %v866
        %v1013 = vmul.f32 %v1012, %v1011
        %v1014 = vmul.f32 0.5, %v1013
        %v1015 = vsub.f32 1.5, %v1014
        %v1016 = vmul.f32 %v1011, %v1015
        %vm1017 = vweird.f32 %v866
        %vm1018 = vweird.f32 %v1011
        %vm1019 = vmor %vm1017, %vm1018
        %v1020 = vsel %vm1019, %v1011, %v1016
        %v1021 = vrsqrt.pop %v867
        %v1022 = vmul.f32 %v1021, %v867
        %v1023 = vmul.f32 %v1022, %v1021
        %v1024 = vmul.f32 0.5, %v1023
        %v1025 = vsub.f32 1.5, %v1024
        %v1026 = vmul.f32 %v1021, %v1025
        %vm1027 = vweird.f32 %v867
        %vm1028 = vweird.f32 %v1021
        %vm1029 = vmor %vm1027, %vm1028
        %v1030 = vsel %vm1029, %v1021, %v1026
        %v1031 = vrsqrt.pop %v868
        %v1032 = vmul.f32 %v1031, %v868
        %v1033 = vmul.f32 %v1032, %v1031
        %v1034 = vmul.f32 0.5, %v1033
        %v1035 = vsub.f32 1.5, %v1034
        %v1036 = vmul.f32 %v1031, %v1035
        %vm1037 = vweird.f32 %v868
        %vm1038 = vweird.f32 %v1031
        %vm1039 = vmor %vm1037, %vm1038
        %v1040 = vsel %vm1039, %v1031, %v1036
        %v1041 = vrsqrt.pop %v869
        %v1042 = vmul.f32 %v1041, %v869
        %v1043 = vmul.f32 %v1042, %v1041
        %v1044 = vmul.f32 0.5, %v1043
        %v1045 = vsub.f32 1.5, %v1044
        %v1046 = vmul.f32 %v1041, %v1045
        %vm1047 = vweird.f32 %v869
        %vm1048 = vweird.f32 %v1041
        %vm1049 = vmor %vm1047, %vm1048
        %v1050 = vsel %vm1049, %v1041, %v1046
        %v1051 = vrsqrt.pop %v870
        %v1052 = vmul.f32 %v1051, %v870
        %v1053 = vmul.f32 %v1052, %v1051
        %v1054 = vmul.f32 0.5, %v1053
        %v1055 = vsub.f32 1.5, %v1054
        %v1056 = vmul.f32 %v1051, %v1055
        %vm1057 = vweird.f32 %v870
        %vm1058 = vweird.f32 %v1051
        %vm1059 = vmor %vm1057, %vm1058
        %v1060 = vsel %vm1059, %v1051, %v1056
        %v1061 = vrsqrt.pop %v871
        %v1062 = vmul.f32 %v1061, %v871
        %v1063 = vmul.f32 %v1062, %v1061
        %v1064 = vmul.f32 0.5, %v1063
        %v1065 = vsub.f32 1.5, %v1064
        %v1066 = vmul.f32 %v1061, %v1065
        %vm1067 = vweird.f32 %v871
        %vm1068 = vweird.f32 %v1061
        %vm1069 = vmor %vm1067, %vm1068
        %v1070 = vsel %vm1069, %v1061, %v1066
        %v1071 = vrsqrt.pop %v872
        %v1072 = vmul.f32 %v1071, %v872
        %v1073 = vmul.f32 %v1072, %v1071
        %v1074 = vmul.f32 0.5, %v1073
        %v1075 = vsub.f32 1.5, %v1074
        %v1076 = vmul.f32 %v1071, %v1075
        %vm1077 = vweird.f32 %v872
        %vm1078 = vweird.f32 %v1071
        %vm1079 = vmor %vm1077, %vm1078
        %v1080 = vsel %vm1079, %v1071, %v1076
        %v1081 = vrsqrt.pop %v873
        %v1082 = vmul.f32 %v1081, %v873
        %v1083 = vmul.f32 %v1082, %v1081
        %v1084 = vmul.f32 0.5, %v1083
        %v1085 = vsub.f32 1.5, %v1084
        %v1086 = vmul.f32 %v1081, %v1085
        %vm1087 = vweird.f32 %v873
        %vm1088 = vweird.f32 %v1081
        %vm1089 = vmor %vm1087, %vm1088
        %v1090 = vsel %vm1089, %v1081, %v1086
        %v1091 = vrsqrt.pop %v874
        %v1092 = vmul.f32 %v1091, %v874
        %v1093 = vmul.f32 %v1092, %v1091
        %v1094 = vmul.f32 0.5, %v1093
        %v1095 = vsub.f32 1.5, %v1094
        %v1096 = vmul.f32 %v1091, %v1095
        %vm1097 = vweird.f32 %v874
        %vm1098 = vweird.f32 %v1091
        %vm1099 = vmor %vm1097, %vm1098
        %v1100 = vsel %vm1099, %v1091, %v1096
        %v1101 = vrsqrt.pop %v875
        %v1102 = vmul.f32 %v1101, %v875
        %v1103 = vmul.f32 %v1102, %v1101
        %v1104 = vmul.f32 0.5, %v1103
        %v1105 = vsub.f32 1.5, %v1104
        %v1106 = vmul.f32 %v1101, %v1105
        %vm1107 = vweird.f32 %v875
        %vm1108 = vweird.f32 %v1101
        %vm1109 = vmor %vm1107, %vm1108
        %v1110 = vsel %vm1109, %v1101, %v1106
        %v1111 = vrsqrt.pop %v876
        %v1112 = vmul.f32 %v1111, %v876
        %v1113 = vmul.f32 %v1112, %v1111
        %v1114 = vmul.f32 0.5, %v1113
        %v1115 = vsub.f32 1.5, %v1114
        %v1116 = vmul.f32 %v1111, %v1115
        %vm1117 = vweird.f32 %v876
        %vm1118 = vweird.f32 %v1111
        %vm1119 = vmor %vm1117, %vm1118
        %v1120 = vsel %vm1119, %v1111, %v1116
        %v1121 = vrsqrt.pop %v877
        %v1122 = vmul.f32 %v1121, %v877
        %v1123 = vmul.f32 %v1122, %v1121
        %v1124 = vmul.f32 0.5, %v1123
        %v1125 = vsub.f32 1.5, %v1124
        %v1126 = vmul.f32 %v1121, %v1125
        %vm1127 = vweird.f32 %v877
        %vm1128 = vweird.f32 %v1121
        %vm1129 = vmor %vm1127, %vm1128
        %v1130 = vsel %vm1129, %v1121, %v1126
        %v1131 = vrsqrt.pop %v878
        %v1132 = vmul.f32 %v1131, %v878
        %v1133 = vmul.f32 %v1132, %v1131
        %v1134 = vmul.f32 0.5, %v1133
        %v1135 = vsub.f32 1.5, %v1134
        %v1136 = vmul.f32 %v1131, %v1135
        %vm1137 = vweird.f32 %v878
        %vm1138 = vweird.f32 %v1131
        %vm1139 = vmor %vm1137, %vm1138
        %v1140 = vsel %vm1139, %v1131, %v1136
        %v1141 = vrsqrt.pop %v879
        %v1142 = vmul.f32 %v1141, %v879
        %v1143 = vmul.f32 %v1142, %v1141
        %v1144 = vmul.f32 0.5, %v1143
        %v1145 = vsub.f32 1.5, %v1144
        %v1146 = vmul.f32 %v1141, %v1145
        %vm1147 = vweird.f32 %v879
        %vm1148 = vweird.f32 %v1141
        %vm1149 = vmor %vm1147, %vm1148
        %v1150 = vsel %vm1149, %v1141, %v1146
        %v1151 = vrsqrt.pop %v880
        %v1152 = vmul.f32 %v1151, %v880
        %v1153 = vmul.f32 %v1152, %v1151
        %v1154 = vmul.f32 0.5, %v1153
        %v1155 = vsub.f32 1.5, %v1154
        %v1156 = vmul.f32 %v1151, %v1155
        %vm1157 = vweird.f32 %v880
        %vm1158 = vweird.f32 %v1151
        %vm1159 = vmor %vm1157, %vm1158
        %v1160 = vsel %vm1159, %v1151, %v1156
        %v1161 = vrsqrt.pop %v881
        %v1162 = vmul.f32 %v1161, %v881
        %v1163 = vmul.f32 %v1162, %v1161
        %v1164 = vmul.f32 0.5, %v1163
        %v1165 = vsub.f32 1.5, %v1164
        %v1166 = vmul.f32 %v1161, %v1165
        %vm1167 = vweird.f32 %v881
        %vm1168 = vweird.f32 %v1161
        %vm1169 = vmor %vm1167, %vm1168
        %v1170 = vsel %vm1169, %v1161, %v1166
        %v1171 = vrsqrt.pop %v882
        %v1172 = vmul.f32 %v1171, %v882
        %v1173 = vmul.f32 %v1172, %v1171
        %v1174 = vmul.f32 0.5, %v1173
        %v1175 = vsub.f32 1.5, %v1174
        %v1176 = vmul.f32 %v1171, %v1175
        %vm1177 = vweird.f32 %v882
        %vm1178 = vweird.f32 %v1171
        %vm1179 = vmor %vm1177, %vm1178
        %v1180 = vsel %vm1179, %v1171, %v1176
        %v1181 = vrsqrt.pop %v883
        %v1182 = vmul.f32 %v1181, %v883
        %v1183 = vmul.f32 %v1182, %v1181
        %v1184 = vmul.f32 0.5, %v1183
        %v1185 = vsub.f32 1.5, %v1184
        %v1186 = vmul.f32 %v1181, %v1185
        %vm1187 = vweird.f32 %v883
        %vm1188 = vweird.f32 %v1181
        %vm1189 = vmor %vm1187, %vm1188
        %v1190 = vsel %vm1189, %v1181, %v1186
        %v1191 = vrsqrt.pop %v884
        %v1192 = vmul.f32 %v1191, %v884
        %v1193 = vmul.f32 %v1192, %v1191
        %v1194 = vmul.f32 0.5, %v1193
        %v1195 = vsub.f32 1.5, %v1194
        %v1196 = vmul.f32 %v1191, %v1195
        %vm1197 = vweird.f32 %v884
        %vm1198 = vweird.f32 %v1191
        %vm1199 = vmor %vm1197, %vm1198
        %v1200 = vsel %vm1199, %v1191, %v1196
        %v1201 = vrsqrt.pop %v885
        %v1202 = vmul.f32 %v1201, %v885
        %v1203 = vmul.f32 %v1202, %v1201
        %v1204 = vmul.f32 0.5, %v1203
        %v1205 = vsub.f32 1.5, %v1204
        %v1206 = vmul.f32 %v1201, %v1205
        %vm1207 = vweird.f32 %v885
        %vm1208 = vweird.f32 %v1201
        %vm1209 = vmor %vm1207, %vm1208
        %v1210 = vsel %vm1209, %v1201, %v1206
        %v1211 = vrsqrt.pop %v886
        %v1212 = vmul.f32 %v1211, %v886
        %v1213 = vmul.f32 %v1212, %v1211
        %v1214 = vmul.f32 0.5, %v1213
        %v1215 = vsub.f32 1.5, %v1214
        %v1216 = vmul.f32 %v1211, %v1215
        %vm1217 = vweird.f32 %v886
        %vm1218 = vweird.f32 %v1211
        %vm1219 = vmor %vm1217, %vm1218
        %v1220 = vsel %vm1219, %v1211, %v1216
        %v1221 = vrsqrt.pop %v887
        %v1222 = vmul.f32 %v1221, %v887
        %v1223 = vmul.f32 %v1222, %v1221
        %v1224 = vmul.f32 0.5, %v1223
        %v1225 = vsub.f32 1.5, %v1224
        %v1226 = vmul.f32 %v1221, %v1225
        %vm1227 = vweird.f32 %v887
        %vm1228 = vweird.f32 %v1221
        %vm1229 = vmor %vm1227, %vm1228
        %v1230 = vsel %vm1229, %v1221, %v1226
        %v1231 = vrsqrt.pop %v888
        %v1232 = vmul.f32 %v1231, %v888
        %v1233 = vmul.f32 %v1232, %v1231
        %v1234 = vmul.f32 0.5, %v1233
        %v1235 = vsub.f32 1.5, %v1234
        %v1236 = vmul.f32 %v1231, %v1235
        %vm1237 = vweird.f32 %v888
        %vm1238 = vweird.f32 %v1231
        %vm1239 = vmor %vm1237, %vm1238
        %v1240 = vsel %vm1239, %v1231, %v1236
        %v1241 = vrsqrt.pop %v889
        %v1242 = vmul.f32 %v1241, %v889
        %v1243 = vmul.f32 %v1242, %v1241
        %v1244 = vmul.f32 0.5, %v1243
        %v1245 = vsub.f32 1.5, %v1244
        %v1246 = vmul.f32 %v1241, %v1245
        %vm1247 = vweird.f32 %v889
        %vm1248 = vweird.f32 %v1241
        %vm1249 = vmor %vm1247, %vm1248
        %v1250 = vsel %vm1249, %v1241, %v1246
        %v1251 = vrsqrt.pop %v890
        %v1252 = vmul.f32 %v1251, %v890
        %v1253 = vmul.f32 %v1252, %v1251
        %v1254 = vmul.f32 0.5, %v1253
        %v1255 = vsub.f32 1.5, %v1254
        %v1256 = vmul.f32 %v1251, %v1255
        %vm1257 = vweird.f32 %v890
        %vm1258 = vweird.f32 %v1251
        %vm1259 = vmor %vm1257, %vm1258
        %v1260 = vsel %vm1259, %v1251, %v1256
        %v1261 = vrsqrt.pop %v891
        %v1262 = vmul.f32 %v1261, %v891
        %v1263 = vmul.f32 %v1262, %v1261
        %v1264 = vmul.f32 0.5, %v1263
        %v1265 = vsub.f32 1.5, %v1264
        %v1266 = vmul.f32 %v1261, %v1265
        %vm1267 = vweird.f32 %v891
        %vm1268 = vweird.f32 %v1261
        %vm1269 = vmor %vm1267, %vm1268
        %v1270 = vsel %vm1269, %v1261, %v1266
        %v1271 = vrsqrt.pop %v892
        %v1272 = vmul.f32 %v1271, %v892
        %v1273 = vmul.f32 %v1272, %v1271
        %v1274 = vmul.f32 0.5, %v1273
        %v1275 = vsub.f32 1.5, %v1274
        %v1276 = vmul.f32 %v1271, %v1275
        %vm1277 = vweird.f32 %v892
        %vm1278 = vweird.f32 %v1271
        %vm1279 = vmor %vm1277, %vm1278
        %v1280 = vsel %vm1279, %v1271, %v1276
        %v1281 = vrsqrt.pop %v893
        %v1282 = vmul.f32 %v1281, %v893
        %v1283 = vmul.f32 %v1282, %v1281
        %v1284 = vmul.f32 0.5, %v1283
        %v1285 = vsub.f32 1.5, %v1284
        %v1286 = vmul.f32 %v1281, %v1285
        %vm1287 = vweird.f32 %v893
        %vm1288 = vweird.f32 %v1281
        %vm1289 = vmor %vm1287, %vm1288
        %v1290 = vsel %vm1289, %v1281, %v1286
        %v1291 = vrsqrt.pop %v894
        %v1292 = vmul.f32 %v1291, %v894
        %v1293 = vmul.f32 %v1292, %v1291
        %v1294 = vmul.f32 0.5, %v1293
        %v1295 = vsub.f32 1.5, %v1294
        %v1296 = vmul.f32 %v1291, %v1295
        %vm1297 = vweird.f32 %v894
        %vm1298 = vweird.f32 %v1291
        %vm1299 = vmor %vm1297, %vm1298
        %v1300 = vsel %vm1299, %v1291, %v1296
        %v1301 = vrsqrt.pop %v895
        %v1302 = vmul.f32 %v1301, %v895
        %v1303 = vmul.f32 %v1302, %v1301
        %v1304 = vmul.f32 0.5, %v1303
        %v1305 = vsub.f32 1.5, %v1304
        %v1306 = vmul.f32 %v1301, %v1305
        %vm1307 = vweird.f32 %v895
        %vm1308 = vweird.f32 %v1301
        %vm1309 = vmor %vm1307, %vm1308
        %v1310 = vsel %vm1309, %v1301, %v1306
        %v1311 = vrsqrt.pop %v896
        %v1312 = vmul.f32 %v1311, %v896
        %v1313 = vmul.f32 %v1312, %v1311
        %v1314 = vmul.f32 0.5, %v1313
        %v1315 = vsub.f32 1.5, %v1314
        %v1316 = vmul.f32 %v1311, %v1315
        %vm1317 = vweird.f32 %v896
        %vm1318 = vweird.f32 %v1311
        %vm1319 = vmor %vm1317, %vm1318
        %v1320 = vsel %vm1319, %v1311, %v1316
        %v1321 = vrsqrt.pop %v897
        %v1322 = vmul.f32 %v1321, %v897
        %v1323 = vmul.f32 %v1322, %v1321
        %v1324 = vmul.f32 0.5, %v1323
        %v1325 = vsub.f32 1.5, %v1324
        %v1326 = vmul.f32 %v1321, %v1325
        %vm1327 = vweird.f32 %v897
        %vm1328 = vweird.f32 %v1321
        %vm1329 = vmor %vm1327, %vm1328
        %v1330 = vsel %vm1329, %v1321, %v1326
        %v1331 = vrsqrt.pop %v898
        %v1332 = vmul.f32 %v1331, %v898
        %v1333 = vmul.f32 %v1332, %v1331
        %v1334 = vmul.f32 0.5, %v1333
        %v1335 = vsub.f32 1.5, %v1334
        %v1336 = vmul.f32 %v1331, %v1335
        %vm1337 = vweird.f32 %v898
        %vm1338 = vweird.f32 %v1331
        %vm1339 = vmor %vm1337, %vm1338
        %v1340 = vsel %vm1339, %v1331, %v1336
        %v1341 = vrsqrt.pop %v899
        %v1342 = vmul.f32 %v1341, %v899
        %v1343 = vmul.f32 %v1342, %v1341
        %v1344 = vmul.f32 0.5, %v1343
        %v1345 = vsub.f32 1.5, %v1344
        %v1346 = vmul.f32 %v1341, %v1345
        %vm1347 = vweird.f32 %v899
        %vm1348 = vweird.f32 %v1341
        %vm1349 = vmor %vm1347, %vm1348
        %v1350 = vsel %vm1349, %v1341, %v1346
        %v1351 = vrsqrt.pop %v900
        %v1352 = vmul.f32 %v1351, %v900
        %v1353 = vmul.f32 %v1352, %v1351
        %v1354 = vmul.f32 0.5, %v1353
        %v1355 = vsub.f32 1.5, %v1354
        %v1356 = vmul.f32 %v1351, %v1355
        %vm1357 = vweird.f32 %v900
        %vm1358 = vweird.f32 %v1351
        %vm1359 = vmor %vm1357, %vm1358
        %v1360 = vsel %vm1359, %v1351, %v1356
        %v1361 = vrsqrt.pop %v901
        %v1362 = vmul.f32 %v1361, %v901
        %v1363 = vmul.f32 %v1362, %v1361
        %v1364 = vmul.f32 0.5, %v1363
        %v1365 = vsub.f32 1.5, %v1364
        %v1366 = vmul.f32 %v1361, %v1365
        %vm1367 = vweird.f32 %v901
        %vm1368 = vweird.f32 %v1361
        %vm1369 = vmor %vm1367, %vm1368
        %v1370 = vsel %vm1369, %v1361, %v1366
        %v1371 = vrsqrt.pop %v902
        %v1372 = vmul.f32 %v1371, %v902
        %v1373 = vmul.f32 %v1372, %v1371
        %v1374 = vmul.f32 0.5, %v1373
        %v1375 = vsub.f32 1.5, %v1374
        %v1376 = vmul.f32 %v1371, %v1375
        %vm1377 = vweird.f32 %v902
        %vm1378 = vweird.f32 %v1371
        %vm1379 = vmor %vm1377, %vm1378
        %v1380 = vsel %vm1379, %v1371, %v1376
        %v1381 = vrsqrt.pop %v903
        %v1382 = vmul.f32 %v1381, %v903
        %v1383 = vmul.f32 %v1382, %v1381
        %v1384 = vmul.f32 0.5, %v1383
        %v1385 = vsub.f32 1.5, %v1384
        %v1386 = vmul.f32 %v1381, %v1385
        %vm1387 = vweird.f32 %v903
        %vm1388 = vweird.f32 %v1381
        %vm1389 = vmor %vm1387, %vm1388
        %v1390 = vsel %vm1389, %v1381, %v1386
        %v1391 = vrsqrt.pop %v904
        %v1392 = vmul.f32 %v1391, %v904
        %v1393 = vmul.f32 %v1392, %v1391
        %v1394 = vmul.f32 0.5, %v1393
        %v1395 = vsub.f32 1.5, %v1394
        %v1396 = vmul.f32 %v1391, %v1395
        %vm1397 = vweird.f32 %v904
        %vm1398 = vweird.f32 %v1391
        %vm1399 = vmor %vm1397, %vm1398
        %v1400 = vsel %vm1399, %v1391, %v1396
        %v1401 = vrsqrt.pop %v905
        %v1402 = vmul.f32 %v1401, %v905
        %v1403 = vmul.f32 %v1402, %v1401
        %v1404 = vmul.f32 0.5, %v1403
        %v1405 = vsub.f32 1.5, %v1404
        %v1406 = vmul.f32 %v1401, %v1405
        %vm1407 = vweird.f32 %v905
        %vm1408 = vweird.f32 %v1401
        %vm1409 = vmor %vm1407, %vm1408
        %v1410 = vsel %vm1409, %v1401, %v1406
        %v1411 = vrsqrt.pop %v906
        %v1412 = vmul.f32 %v1411, %v906
        %v1413 = vmul.f32 %v1412, %v1411
        %v1414 = vmul.f32 0.5, %v1413
        %v1415 = vsub.f32 1.5, %v1414
        %v1416 = vmul.f32 %v1411, %v1415
        %vm1417 = vweird.f32 %v906
        %vm1418 = vweird.f32 %v1411
        %vm1419 = vmor %vm1417, %vm1418
        %v1420 = vsel %vm1419, %v1411, %v1416
        %v1421 = vrsqrt.pop %v907
        %v1422 = vmul.f32 %v1421, %v907
        %v1423 = vmul.f32 %v1422, %v1421
        %v1424 = vmul.f32 0.5, %v1423
        %v1425 = vsub.f32 1.5, %v1424
        %v1426 = vmul.f32 %v1421, %v1425
        %vm1427 = vweird.f32 %v907
        %vm1428 = vweird.f32 %v1421
        %vm1429 = vmor %vm1427, %vm1428
        %v1430 = vsel %vm1429, %v1421, %v1426
        %v1431 = vrsqrt.pop %v908
        %v1432 = vmul.f32 %v1431, %v908
        %v1433 = vmul.f32 %v1432, %v1431
        %v1434 = vmul.f32 0.5, %v1433
        %v1435 = vsub.f32 1.5, %v1434
        %v1436 = vmul.f32 %v1431, %v1435
        %vm1437 = vweird.f32 %v908
        %vm1438 = vweird.f32 %v1431
        %vm1439 = vmor %vm1437, %vm1438
        %v1440 = vsel %vm1439, %v1431, %v1436
        %v1441 = vrsqrt.pop %v909
        %v1442 = vmul.f32 %v1441, %v909
        %v1443 = vmul.f32 %v1442, %v1441
        %v1444 = vmul.f32 0.5, %v1443
        %v1445 = vsub.f32 1.5, %v1444
        %v1446 = vmul.f32 %v1441, %v1445
        %vm1447 = vweird.f32 %v909
        %vm1448 = vweird.f32 %v1441
        %vm1449 = vmor %vm1447, %vm1448
        %v1450 = vsel %vm1449, %v1441, %v1446
        %v1451 = vrsqrt.pop %v910
        %v1452 = vmul.f32 %v1451, %v910
        %v1453 = vmul.f32 %v1452, %v1451
        %v1454 = vmul.f32 0.5, %v1453
        %v1455 = vsub.f32 1.5, %v1454
        %v1456 = vmul.f32 %v1451, %v1455
        %vm1457 = vweird.f32 %v910
        %vm1458 = vweird.f32 %v1451
        %vm1459 = vmor %vm1457, %vm1458
        %v1460 = vsel %vm1459, %v1451, %v1456
        %v1461 = vrsqrt.pop %v911
        %v1462 = vmul.f32 %v1461, %v911
        %v1463 = vmul.f32 %v1462, %v1461
        %v1464 = vmul.f32 0.5, %v1463
        %v1465 = vsub.f32 1.5, %v1464
        %v1466 = vmul.f32 %v1461, %v1465
        %vm1467 = vweird.f32 %v911
        %vm1468 = vweird.f32 %v1461
        %vm1469 = vmor %vm1467, %vm1468
        %v1470 = vsel %vm1469, %v1461, %v1466
        %v1471 = vrsqrt.pop %v912
        %v1472 = vmul.f32 %v1471, %v912
        %v1473 = vmul.f32 %v1472, %v1471
        %v1474 = vmul.f32 0.5, %v1473
        %v1475 = vsub.f32 1.5, %v1474
        %v1476 = vmul.f32 %v1471, %v1475
        %vm1477 = vweird.f32 %v912
        %vm1478 = vweird.f32 %v1471
        %vm1479 = vmor %vm1477, %vm1478
        %v1480 = vsel %vm1479, %v1471, %v1476
        %v1481 = vrsqrt.pop %v913
        %v1482 = vmul.f32 %v1481, %v913
        %v1483 = vmul.f32 %v1482, %v1481
        %v1484 = vmul.f32 0.5, %v1483
        %v1485 = vsub.f32 1.5, %v1484
        %v1486 = vmul.f32 %v1481, %v1485
        %vm1487 = vweird.f32 %v913
        %vm1488 = vweird.f32 %v1481
        %vm1489 = vmor %vm1487, %vm1488
        %v1490 = vsel %vm1489, %v1481, %v1486
        %v1491 = vrsqrt.pop %v914
        %v1492 = vmul.f32 %v1491, %v914
        %v1493 = vmul.f32 %v1492, %v1491
        %v1494 = vmul.f32 0.5, %v1493
        %v1495 = vsub.f32 1.5, %v1494
        %v1496 = vmul.f32 %v1491, %v1495
        %vm1497 = vweird.f32 %v914
        %vm1498 = vweird.f32 %v1491
        %vm1499 = vmor %vm1497, %vm1498
        %v1500 = vsel %vm1499, %v1491, %v1496
        %v1501 = vrsqrt.pop %v915
        %v1502 = vmul.f32 %v1501, %v915
        %v1503 = vmul.f32 %v1502, %v1501
        %v1504 = vmul.f32 0.5, %v1503
        %v1505 = vsub.f32 1.5, %v1504
        %v1506 = vmul.f32 %v1501, %v1505
        %vm1507 = vweird.f32 %v915
        %vm1508 = vweird.f32 %v1501
        %vm1509 = vmor %vm1507, %vm1508
        %v1510 = vsel %vm1509, %v1501, %v1506
        %v1511 = vrsqrt.pop %v916
        %v1512 = vmul.f32 %v1511, %v916
        %v1513 = vmul.f32 %v1512, %v1511
        %v1514 = vmul.f32 0.5, %v1513
        %v1515 = vsub.f32 1.5, %v1514
        %v1516 = vmul.f32 %v1511, %v1515
        %vm1517 = vweird.f32 %v916
        %vm1518 = vweird.f32 %v1511
        %vm1519 = vmor %vm1517, %vm1518
        %v1520 = vsel %vm1519, %v1511, %v1516
        %v1521 = vrsqrt.pop %v917
        %v1522 = vmul.f32 %v1521, %v917
        %v1523 = vmul.f32 %v1522, %v1521
        %v1524 = vmul.f32 0.5, %v1523
        %v1525 = vsub.f32 1.5, %v1524
        %v1526 = vmul.f32 %v1521, %v1525
        %vm1527 = vweird.f32 %v917
        %vm1528 = vweird.f32 %v1521
        %vm1529 = vmor %vm1527, %vm1528
        %v1530 = vsel %vm1529, %v1521, %v1526
        %v1531 = vrsqrt.pop %v918
        %v1532 = vmul.f32 %v1531, %v918
        %v1533 = vmul.f32 %v1532, %v1531
        %v1534 = vmul.f32 0.5, %v1533
        %v1535 = vsub.f32 1.5, %v1534
        %v1536 = vmul.f32 %v1531, %v1535
        %vm1537 = vweird.f32 %v918
        %vm1538 = vweird.f32 %v1531
        %vm1539 = vmor %vm1537, %vm1538
        %v1540 = vsel %vm1539, %v1531, %v1536
        %v1541 = vrsqrt.pop %v919
        %v1542 = vmul.f32 %v1541, %v919
        %v1543 = vmul.f32 %v1542, %v1541
        %v1544 = vmul.f32 0.5, %v1543
        %v1545 = vsub.f32 1.5, %v1544
        %v1546 = vmul.f32 %v1541, %v1545
        %vm1547 = vweird.f32 %v919
        %vm1548 = vweird.f32 %v1541
        %vm1549 = vmor %vm1547, %vm1548
        %v1550 = vsel %vm1549, %v1541, %v1546
        %v1551 = vrsqrt.pop %v920
        %v1552 = vmul.f32 %v1551, %v920
        %v1553 = vmul.f32 %v1552, %v1551
        %v1554 = vmul.f32 0.5, %v1553
        %v1555 = vsub.f32 1.5, %v1554
        %v1556 = vmul.f32 %v1551, %v1555
        %vm1557 = vweird.f32 %v920
        %vm1558 = vweird.f32 %v1551
        %vm1559 = vmor %vm1557, %vm1558
        %v1560 = vsel %vm1559, %v1551, %v1556
        %v1561 = vmul.f32 %v537, %v930
        %v1562 = vmul.f32 %v538, %v940
        %v1563 = vmul.f32 %v539, %v950
        %v1564 = vmul.f32 %v540, %v960
        %v1565 = vmul.f32 %v541, %v970
        %v1566 = vmul.f32 %v542, %v980
        %v1567 = vmul.f32 %v543, %v990
        %v1568 = vmul.f32 %v544, %v1000
        %v1569 = vmul.f32 %v545, %v1010
        %v1570 = vmul.f32 %v546, %v1020
        %v1571 = vmul.f32 %v547, %v1030
        %v1572 = vmul.f32 %v548, %v1040
        %v1573 = vmul.f32 %v549, %v1050
        %v1574 = vmul.f32 %v550, %v1060
        %v1575 = vmul.f32 %v551, %v1070
        %v1576 = vmul.f32 %v552, %v1080
        %v1577 = vmul.f32 %v553, %v1090
        %v1578 = vmul.f32 %v554, %v1100
        %v1579 = vmul.f32 %v555, %v1110
        %v1580 = vmul.f32 %v556, %v1120
        %v1581 = vmul.f32 %v557, %v1130
        %v1582 = vmul.f32 %v558, %v1140
        %v1583 = vmul.f32 %v559, %v1150
        %v1584 = vmul.f32 %v560, %v1160
        %v1585 = vmul.f32 %v561, %v1170
        %v1586 = vmul.f32 %v562, %v1180
        %v1587 = vmul.f32 %v563, %v1190
        %v1588 = vmul.f32 %v564, %v1200
        %v1589 = vmul.f32 %v565, %v1210
        %v1590 = vmul.f32 %v566, %v1220
        %v1591 = vmul.f32 %v567, %v1230
        %v1592 = vmul.f32 %v568, %v1240
        %v1593 = vmul.f32 %v569, %v1250
        %v1594 = vmul.f32 %v570, %v1260
        %v1595 = vmul.f32 %v571, %v1270
        %v1596 = vmul.f32 %v572, %v1280
        %v1597 = vmul.f32 %v573, %v1290
        %v1598 = vmul.f32 %v574, %v1300
        %v1599 = vmul.f32 %v575, %v1310
        %v1600 = vmul.f32 %v576, %v1320
        %v1601 = vmul.f32 %v577, %v1330
        %v1602 = vmul.f32 %v578, %v1340
        %v1603 = vmul.f32 %v579, %v1350
        %v1604 = vmul.f32 %v580, %v1360
        %v1605 = vmul.f32 %v581, %v1370
        %v1606 = vmul.f32 %v582, %v1380
        %v1607 = vmul.f32 %v583, %v1390
        %v1608 = vmul.f32 %v584, %v1400
        %v1609 = vmul.f32 %v585, %v1410
        %v1610 = vmul.f32 %v586, %v1420
        %v1611 = vmul.f32 %v587, %v1430
        %v1612 = vmul.f32 %v588, %v1440
        %v1613 = vmul.f32 %v589, %v1450
        %v1614 = vmul.f32 %v590, %v1460
        %v1615 = vmul.f32 %v591, %v1470
        %v1616 = vmul.f32 %v592, %v1480
        %v1617 = vmul.f32 %v593, %v1490
        %v1618 = vmul.f32 %v594, %v1500
        %v1619 = vmul.f32 %v595, %v1510
        %v1620 = vmul.f32 %v596, %v1520
        %v1621 = vmul.f32 %v597, %v1530
        %v1622 = vmul.f32 %v598, %v1540
        %v1623 = vmul.f32 %v599, %v1550
        %v1624 = vmul.f32 %v600, %v1560
        %v1625 = vpack.c.bf16 %v1562, %v1561
        %v1626 = vpack.c.bf16 %v1564, %v1563
        %v1627 = vpack.c.bf16 %v1566, %v1565
        %v1628 = vpack.c.bf16 %v1568, %v1567
        %v1629 = vpack.c.bf16 %v1570, %v1569
        %v1630 = vpack.c.bf16 %v1572, %v1571
        %v1631 = vpack.c.bf16 %v1574, %v1573
        %v1632 = vpack.c.bf16 %v1576, %v1575
        %v1633 = vpack.c.bf16 %v1578, %v1577
        %v1634 = vpack.c.bf16 %v1580, %v1579
        %v1635 = vpack.c.bf16 %v1582, %v1581
        %v1636 = vpack.c.bf16 %v1584, %v1583
        %v1637 = vpack.c.bf16 %v1586, %v1585
        %v1638 = vpack.c.bf16 %v1588, %v1587
        %v1639 = vpack.c.bf16 %v1590, %v1589
        %v1640 = vpack.c.bf16 %v1592, %v1591
        %v1641 = vpack.c.bf16 %v1594, %v1593
        %v1642 = vpack.c.bf16 %v1596, %v1595
        %v1643 = vpack.c.bf16 %v1598, %v1597
        %v1644 = vpack.c.bf16 %v1600, %v1599
        %v1645 = vpack.c.bf16 %v1602, %v1601
        %v1646 = vpack.c.bf16 %v1604, %v1603
        %v1647 = vpack.c.bf16 %v1606, %v1605
        %v1648 = vpack.c.bf16 %v1608, %v1607
        %v1649 = vpack.c.bf16 %v1610, %v1609
        %v1650 = vpack.c.bf16 %v1612, %v1611
        %v1651 = vpack.c.bf16 %v1614, %v1613
        %v1652 = vpack.c.bf16 %v1616, %v1615
        %v1653 = vpack.c.bf16 %v1618, %v1617
        %v1654 = vpack.c.bf16 %v1620, %v1619
        %v1655 = vpack.c.bf16 %v1622, %v1621
        %v1656 = vpack.c.bf16 %v1624, %v1623
        %v1657 = vld [vmem:[#allocation5] sm:$0xf]
        %v1658 = vld [vmem:[#allocation5 + $0x4] sm:$0xf]
        %v1659 = vld [vmem:[#allocation5 + $0x8] sm:$0xf]
        %v1660 = vld [vmem:[#allocation5 + $0xc] sm:$0xf]
        %v1661 = vld [vmem:[#allocation5 + $0x10] sm:$0xf]
        %v1662 = vld [vmem:[#allocation5 + $0x14] sm:$0xf]
        %v1663 = vld [vmem:[#allocation5 + $0x18] sm:$0xf]
        %v1664 = vld [vmem:[#allocation5 + $0x1c] sm:$0xf]
        %v1665 = vld [vmem:[#allocation5 + $0x20] sm:$0xf]
        %v1666 = vld [vmem:[#allocation5 + $0x24] sm:$0xf]
        %v1667 = vld [vmem:[#allocation5 + $0x28] sm:$0xf]
        %v1668 = vld [vmem:[#allocation5 + $0x2c] sm:$0xf]
        %v1669 = vld [vmem:[#allocation5 + $0x30] sm:$0xf]
        %v1670 = vld [vmem:[#allocation5 + $0x34] sm:$0xf]
        %v1671 = vld [vmem:[#allocation5 + $0x38] sm:$0xf]
        %v1672 = vld [vmem:[#allocation5 + $0x3c] sm:$0xf]
        %v1673 = vld [vmem:[%s2] sm:$0x1]
        %v1675 = vperm.slane %v1673, 0
        %v1693 = vunpack.c.l.b16 %v1657
        %v1694 = vunpack.c.l.b16 %v1658
        %v1695 = vunpack.c.l.b16 %v1659
        %v1696 = vunpack.c.l.b16 %v1660
        %v1697 = vunpack.c.l.b16 %v1661
        %v1698 = vunpack.c.l.b16 %v1662
        %v1699 = vunpack.c.l.b16 %v1663
        %v1700 = vunpack.c.l.b16 %v1664
        %v1701 = vunpack.c.l.b16 %v1665
        %v1702 = vunpack.c.l.b16 %v1666
        %v1703 = vunpack.c.l.b16 %v1667
        %v1704 = vunpack.c.l.b16 %v1668
        %v1705 = vunpack.c.l.b16 %v1669
        %v1706 = vunpack.c.l.b16 %v1670
        %v1707 = vunpack.c.l.b16 %v1671
        %v1708 = vunpack.c.l.b16 %v1672
        %v1709 = vpack.c.b16 %v1694, %v1693
        %v1710 = vpack.c.b16 %v1696, %v1695
        %v1711 = vpack.c.b16 %v1698, %v1697
        %v1712 = vpack.c.b16 %v1700, %v1699
        %v1713 = vpack.c.b16 %v1702, %v1701
        %v1714 = vpack.c.b16 %v1704, %v1703
        %v1715 = vpack.c.b16 %v1706, %v1705
        %v1716 = vpack.c.b16 %v1708, %v1707
        %1725 = vmatpush.bf16.msra.mxu0 %v1716
        %1726 = vmatpush.bf16.msra.mxu0 %v1715
        %1727 = vmatpush.bf16.msra.mxu0 %v1714
        %1728 = vmatpush.bf16.msra.mxu0 %v1713
        %1729 = vmatpush.bf16.msra.mxu0 %v1712
        %1730 = vmatpush.bf16.msra.mxu0 %v1711
        %1731 = vmatpush.bf16.msra.mxu0 %v1710
        %1732 = vmatpush.bf16.msra.mxu0 %v1709
        %1733 = vmatmul.bf16.gmra.mxu0 %v1625
        %v1734 = vpop.f32.mrf.mxu0
        %v1735 = vadd.f32 %v1675, %v1734
        %v1736 = vpop.f32.mrf.mxu0
        %v1737 = vadd.f32 %v1675, %v1736
        %1738 = vmatmul.bf16.gmra.mxu0 %v1626
        %v1739 = vpop.f32.mrf.mxu0
        %v1740 = vadd.f32 %v1675, %v1739
        %v1741 = vpop.f32.mrf.mxu0
        %v1742 = vadd.f32 %v1675, %v1741
        %1743 = vmatmul.bf16.gmra.mxu0 %v1627
        %v1744 = vpop.f32.mrf.mxu0
        %v1745 = vadd.f32 %v1675, %v1744
        %v1746 = vpop.f32.mrf.mxu0
        %v1747 = vadd.f32 %v1675, %v1746
        %1748 = vmatmul.bf16.gmra.mxu0 %v1628
        %v1749 = vpop.f32.mrf.mxu0
        %v1750 = vadd.f32 %v1675, %v1749
        %v1751 = vpop.f32.mrf.mxu0
        %v1752 = vadd.f32 %v1675, %v1751
        %1753 = vmatmul.bf16.gmra.mxu0 %v1629
        %v1754 = vpop.f32.mrf.mxu0
        %v1755 = vadd.f32 %v1675, %v1754
        %v1756 = vpop.f32.mrf.mxu0
        %v1757 = vadd.f32 %v1675, %v1756
        %1758 = vmatmul.bf16.gmra.mxu0 %v1630
        %v1759 = vpop.f32.mrf.mxu0
        %v1760 = vadd.f32 %v1675, %v1759
        %v1761 = vpop.f32.mrf.mxu0
        %v1762 = vadd.f32 %v1675, %v1761
        %1763 = vmatmul.bf16.gmra.mxu0 %v1631
        %v1764 = vpop.f32.mrf.mxu0
        %v1765 = vadd.f32 %v1675, %v1764
        %v1766 = vpop.f32.mrf.mxu0
        %v1767 = vadd.f32 %v1675, %v1766
        %1768 = vmatmul.bf16.gmra.mxu0 %v1632
        %v1769 = vpop.f32.mrf.mxu0
        %v1770 = vadd.f32 %v1675, %v1769
        %v1771 = vpop.f32.mrf.mxu0
        %v1772 = vadd.f32 %v1675, %v1771
        %1773 = vmatmul.bf16.gmra.mxu0 %v1633
        %v1774 = vpop.f32.mrf.mxu0
        %v1775 = vadd.f32 %v1675, %v1774
        %v1776 = vpop.f32.mrf.mxu0
        %v1777 = vadd.f32 %v1675, %v1776
        %1778 = vmatmul.bf16.gmra.mxu0 %v1634
        %v1779 = vpop.f32.mrf.mxu0
        %v1780 = vadd.f32 %v1675, %v1779
        %v1781 = vpop.f32.mrf.mxu0
        %v1782 = vadd.f32 %v1675, %v1781
        %1783 = vmatmul.bf16.gmra.mxu0 %v1635
        %v1784 = vpop.f32.mrf.mxu0
        %v1785 = vadd.f32 %v1675, %v1784
        %v1786 = vpop.f32.mrf.mxu0
        %v1787 = vadd.f32 %v1675, %v1786
        %1788 = vmatmul.bf16.gmra.mxu0 %v1636
        %v1789 = vpop.f32.mrf.mxu0
        %v1790 = vadd.f32 %v1675, %v1789
        %v1791 = vpop.f32.mrf.mxu0
        %v1792 = vadd.f32 %v1675, %v1791
        %1793 = vmatmul.bf16.gmra.mxu0 %v1637
        %v1794 = vpop.f32.mrf.mxu0
        %v1795 = vadd.f32 %v1675, %v1794
        %v1796 = vpop.f32.mrf.mxu0
        %v1797 = vadd.f32 %v1675, %v1796
        %1798 = vmatmul.bf16.gmra.mxu0 %v1638
        %v1799 = vpop.f32.mrf.mxu0
        %v1800 = vadd.f32 %v1675, %v1799
        %v1801 = vpop.f32.mrf.mxu0
        %v1802 = vadd.f32 %v1675, %v1801
        %1803 = vmatmul.bf16.gmra.mxu0 %v1639
        %v1804 = vpop.f32.mrf.mxu0
        %v1805 = vadd.f32 %v1675, %v1804
        %v1806 = vpop.f32.mrf.mxu0
        %v1807 = vadd.f32 %v1675, %v1806
        %1808 = vmatmul.bf16.gmra.mxu0 %v1640
        %v1809 = vpop.f32.mrf.mxu0
        %v1810 = vadd.f32 %v1675, %v1809
        %v1811 = vpop.f32.mrf.mxu0
        %v1812 = vadd.f32 %v1675, %v1811
        %1813 = vmatmul.bf16.gmra.mxu0 %v1641
        %v1814 = vpop.f32.mrf.mxu0
        %v1815 = vadd.f32 %v1675, %v1814
        %v1816 = vpop.f32.mrf.mxu0
        %v1817 = vadd.f32 %v1675, %v1816
        %1818 = vmatmul.bf16.gmra.mxu0 %v1642
        %v1819 = vpop.f32.mrf.mxu0
        %v1820 = vadd.f32 %v1675, %v1819
        %v1821 = vpop.f32.mrf.mxu0
        %v1822 = vadd.f32 %v1675, %v1821
        %1823 = vmatmul.bf16.gmra.mxu0 %v1643
        %v1824 = vpop.f32.mrf.mxu0
        %v1825 = vadd.f32 %v1675, %v1824
        %v1826 = vpop.f32.mrf.mxu0
        %v1827 = vadd.f32 %v1675, %v1826
        %1828 = vmatmul.bf16.gmra.mxu0 %v1644
        %v1829 = vpop.f32.mrf.mxu0
        %v1830 = vadd.f32 %v1675, %v1829
        %v1831 = vpop.f32.mrf.mxu0
        %v1832 = vadd.f32 %v1675, %v1831
        %1833 = vmatmul.bf16.gmra.mxu0 %v1645
        %v1834 = vpop.f32.mrf.mxu0
        %v1835 = vadd.f32 %v1675, %v1834
        %v1836 = vpop.f32.mrf.mxu0
        %v1837 = vadd.f32 %v1675, %v1836
        %1838 = vmatmul.bf16.gmra.mxu0 %v1646
        %v1839 = vpop.f32.mrf.mxu0
        %v1840 = vadd.f32 %v1675, %v1839
        %v1841 = vpop.f32.mrf.mxu0
        %v1842 = vadd.f32 %v1675, %v1841
        %1843 = vmatmul.bf16.gmra.mxu0 %v1647
        %v1844 = vpop.f32.mrf.mxu0
        %v1845 = vadd.f32 %v1675, %v1844
        %v1846 = vpop.f32.mrf.mxu0
        %v1847 = vadd.f32 %v1675, %v1846
        %1848 = vmatmul.bf16.gmra.mxu0 %v1648
        %v1849 = vpop.f32.mrf.mxu0
        %v1850 = vadd.f32 %v1675, %v1849
        %v1851 = vpop.f32.mrf.mxu0
        %v1852 = vadd.f32 %v1675, %v1851
        %1853 = vmatmul.bf16.gmra.mxu0 %v1649
        %v1854 = vpop.f32.mrf.mxu0
        %v1855 = vadd.f32 %v1675, %v1854
        %v1856 = vpop.f32.mrf.mxu0
        %v1857 = vadd.f32 %v1675, %v1856
        %1858 = vmatmul.bf16.gmra.mxu0 %v1650
        %v1859 = vpop.f32.mrf.mxu0
        %v1860 = vadd.f32 %v1675, %v1859
        %v1861 = vpop.f32.mrf.mxu0
        %v1862 = vadd.f32 %v1675, %v1861
        %1863 = vmatmul.bf16.gmra.mxu0 %v1651
        %v1864 = vpop.f32.mrf.mxu0
        %v1865 = vadd.f32 %v1675, %v1864
        %v1866 = vpop.f32.mrf.mxu0
        %v1867 = vadd.f32 %v1675, %v1866
        %1868 = vmatmul.bf16.gmra.mxu0 %v1652
        %v1869 = vpop.f32.mrf.mxu0
        %v1870 = vadd.f32 %v1675, %v1869
        %v1871 = vpop.f32.mrf.mxu0
        %v1872 = vadd.f32 %v1675, %v1871
        %1873 = vmatmul.bf16.gmra.mxu0 %v1653
        %v1874 = vpop.f32.mrf.mxu0
        %v1875 = vadd.f32 %v1675, %v1874
        %v1876 = vpop.f32.mrf.mxu0
        %v1877 = vadd.f32 %v1675, %v1876
        %1878 = vmatmul.bf16.gmra.mxu0 %v1654
        %v1879 = vpop.f32.mrf.mxu0
        %v1880 = vadd.f32 %v1675, %v1879
        %v1881 = vpop.f32.mrf.mxu0
        %v1882 = vadd.f32 %v1675, %v1881
        %1883 = vmatmul.bf16.gmra.mxu0 %v1655
        %v1884 = vpop.f32.mrf.mxu0
        %v1885 = vadd.f32 %v1675, %v1884
        %v1886 = vpop.f32.mrf.mxu0
        %v1887 = vadd.f32 %v1675, %v1886
        %1888 = vmatmul.bf16.gmra.mxu0 %v1656
        %v1889 = vpop.f32.mrf.mxu0
        %v1890 = vadd.f32 %v1675, %v1889
        %v1891 = vpop.f32.mrf.mxu0
        %v1892 = vadd.f32 %v1675, %v1891
        %1893 = vdwg.mxu0
        %v1894 = vpack.c.bf16 %v1735, %v1735
        %v1895 = vpack.c.bf16 %v1737, %v1737
        %v1896 = vpack.c.bf16 %v1740, %v1740
        %v1897 = vpack.c.bf16 %v1742, %v1742
        %v1898 = vpack.c.bf16 %v1745, %v1745
        %v1899 = vpack.c.bf16 %v1747, %v1747
        %v1900 = vpack.c.bf16 %v1750, %v1750
        %v1901 = vpack.c.bf16 %v1752, %v1752
        %v1902 = vpack.c.bf16 %v1755, %v1755
        %v1903 = vpack.c.bf16 %v1757, %v1757
        %v1904 = vpack.c.bf16 %v1760, %v1760
        %v1905 = vpack.c.bf16 %v1762, %v1762
        %v1906 = vpack.c.bf16 %v1765, %v1765
        %v1907 = vpack.c.bf16 %v1767, %v1767
        %v1908 = vpack.c.bf16 %v1770, %v1770
        %v1909 = vpack.c.bf16 %v1772, %v1772
        %v1910 = vpack.c.bf16 %v1775, %v1775
        %v1911 = vpack.c.bf16 %v1777, %v1777
        %v1912 = vpack.c.bf16 %v1780, %v1780
        %v1913 = vpack.c.bf16 %v1782, %v1782
        %v1914 = vpack.c.bf16 %v1785, %v1785
        %v1915 = vpack.c.bf16 %v1787, %v1787
        %v1916 = vpack.c.bf16 %v1790, %v1790
        %v1917 = vpack.c.bf16 %v1792, %v1792
        %v1918 = vpack.c.bf16 %v1795, %v1795
        %v1919 = vpack.c.bf16 %v1797, %v1797
        %v1920 = vpack.c.bf16 %v1800, %v1800
        %v1921 = vpack.c.bf16 %v1802, %v1802
        %v1922 = vpack.c.bf16 %v1805, %v1805
        %v1923 = vpack.c.bf16 %v1807, %v1807
        %v1924 = vpack.c.bf16 %v1810, %v1810
        %v1925 = vpack.c.bf16 %v1812, %v1812
        %v1926 = vpack.c.bf16 %v1815, %v1815
        %v1927 = vpack.c.bf16 %v1817, %v1817
        %v1928 = vpack.c.bf16 %v1820, %v1820
        %v1929 = vpack.c.bf16 %v1822, %v1822
        %v1930 = vpack.c.bf16 %v1825, %v1825
        %v1931 = vpack.c.bf16 %v1827, %v1827
        %v1932 = vpack.c.bf16 %v1830, %v1830
        %v1933 = vpack.c.bf16 %v1832, %v1832
        %v1934 = vpack.c.bf16 %v1835, %v1835
        %v1935 = vpack.c.bf16 %v1837, %v1837
        %v1936 = vpack.c.bf16 %v1840, %v1840
        %v1937 = vpack.c.bf16 %v1842, %v1842
        %v1938 = vpack.c.bf16 %v1845, %v1845
        %v1939 = vpack.c.bf16 %v1847, %v1847
        %v1940 = vpack.c.bf16 %v1850, %v1850
        %v1941 = vpack.c.bf16 %v1852, %v1852
        %v1942 = vpack.c.bf16 %v1855, %v1855
        %v1943 = vpack.c.bf16 %v1857, %v1857
        %v1944 = vpack.c.bf16 %v1860, %v1860
        %v1945 = vpack.c.bf16 %v1862, %v1862
        %v1946 = vpack.c.bf16 %v1865, %v1865
        %v1947 = vpack.c.bf16 %v1867, %v1867
        %v1948 = vpack.c.bf16 %v1870, %v1870
        %v1949 = vpack.c.bf16 %v1872, %v1872
        %v1950 = vpack.c.bf16 %v1875, %v1875
        %v1951 = vpack.c.bf16 %v1877, %v1877
        %v1952 = vpack.c.bf16 %v1880, %v1880
        %v1953 = vpack.c.bf16 %v1882, %v1882
        %v1954 = vpack.c.bf16 %v1885, %v1885
        %v1955 = vpack.c.bf16 %v1887, %v1887
        %v1956 = vpack.c.bf16 %v1890, %v1890
        %v1957 = vpack.c.bf16 %v1892, %v1892
        %1958 = vst [vmem:[%s207] sm:$0xf] %v1894
        %1959 = vst [vmem:[%s207 + $0x4] sm:$0xf] %v1895
        %1960 = vst [vmem:[%s207 + $0x8] sm:$0xf] %v1896
        %1961 = vst [vmem:[%s207 + $0xc] sm:$0xf] %v1897
        %1962 = vst [vmem:[%s207 + $0x10] sm:$0xf] %v1898
        %1963 = vst [vmem:[%s207 + $0x14] sm:$0xf] %v1899
        %1964 = vst [vmem:[%s207 + $0x18] sm:$0xf] %v1900
        %1965 = vst [vmem:[%s207 + $0x1c] sm:$0xf] %v1901
        %1966 = vst [vmem:[%s207 + $0x20] sm:$0xf] %v1902
        %1967 = vst [vmem:[%s207 + $0x24] sm:$0xf] %v1903
        %1968 = vst [vmem:[%s207 + $0x28] sm:$0xf] %v1904
        %1969 = vst [vmem:[%s207 + $0x2c] sm:$0xf] %v1905
        %1970 = vst [vmem:[%s207 + $0x30] sm:$0xf] %v1906
        %1971 = vst [vmem:[%s207 + $0x34] sm:$0xf] %v1907
        %1972 = vst [vmem:[%s207 + $0x38] sm:$0xf] %v1908
        %1973 = vst [vmem:[%s207 + $0x3c] sm:$0xf] %v1909
        %1974 = vst [vmem:[%s207 + $0x40] sm:$0xf] %v1910
        %1975 = vst [vmem:[%s207 + $0x44] sm:$0xf] %v1911
        %1976 = vst [vmem:[%s207 + $0x48] sm:$0xf] %v1912
        %1977 = vst [vmem:[%s207 + $0x4c] sm:$0xf] %v1913
        %1978 = vst [vmem:[%s207 + $0x50] sm:$0xf] %v1914
        %1979 = vst [vmem:[%s207 + $0x54] sm:$0xf] %v1915
        %1980 = vst [vmem:[%s207 + $0x58] sm:$0xf] %v1916
        %1981 = vst [vmem:[%s207 + $0x5c] sm:$0xf] %v1917
        %1982 = vst [vmem:[%s207 + $0x60] sm:$0xf] %v1918
        %1983 = vst [vmem:[%s207 + $0x64] sm:$0xf] %v1919
        %1984 = vst [vmem:[%s207 + $0x68] sm:$0xf] %v1920
        %1985 = vst [vmem:[%s207 + $0x6c] sm:$0xf] %v1921
        %1986 = vst [vmem:[%s207 + $0x70] sm:$0xf] %v1922
        %1987 = vst [vmem:[%s207 + $0x74] sm:$0xf] %v1923
        %1988 = vst [vmem:[%s207 + $0x78] sm:$0xf] %v1924
        %1989 = vst [vmem:[%s207 + $0x7c] sm:$0xf] %v1925
        %1990 = vst [vmem:[%s207 + $0x80] sm:$0xf] %v1926
        %1991 = vst [vmem:[%s207 + $0x84] sm:$0xf] %v1927
        %1992 = vst [vmem:[%s207 + $0x88] sm:$0xf] %v1928
        %1993 = vst [vmem:[%s207 + $0x8c] sm:$0xf] %v1929
        %1994 = vst [vmem:[%s207 + $0x90] sm:$0xf] %v1930
        %1995 = vst [vmem:[%s207 + $0x94] sm:$0xf] %v1931
        %1996 = vst [vmem:[%s207 + $0x98] sm:$0xf] %v1932
        %1997 = vst [vmem:[%s207 + $0x9c] sm:$0xf] %v1933
        %1998 = vst [vmem:[%s207 + $0xa0] sm:$0xf] %v1934
        %1999 = vst [vmem:[%s207 + $0xa4] sm:$0xf] %v1935
        %2000 = vst [vmem:[%s207 + $0xa8] sm:$0xf] %v1936
        %2001 = vst [vmem:[%s207 + $0xac] sm:$0xf] %v1937
        %2002 = vst [vmem:[%s207 + $0xb0] sm:$0xf] %v1938
        %2003 = vst [vmem:[%s207 + $0xb4] sm:$0xf] %v1939
        %2004 = vst [vmem:[%s207 + $0xb8] sm:$0xf] %v1940
        %2005 = vst [vmem:[%s207 + $0xbc] sm:$0xf] %v1941
        %2006 = vst [vmem:[%s207 + $0xc0] sm:$0xf] %v1942
        %2007 = vst [vmem:[%s207 + $0xc4] sm:$0xf] %v1943
        %2008 = vst [vmem:[%s207 + $0xc8] sm:$0xf] %v1944
        %2009 = vst [vmem:[%s207 + $0xcc] sm:$0xf] %v1945
        %2010 = vst [vmem:[%s207 + $0xd0] sm:$0xf] %v1946
        %2011 = vst [vmem:[%s207 + $0xd4] sm:$0xf] %v1947
        %2012 = vst [vmem:[%s207 + $0xd8] sm:$0xf] %v1948
        %2013 = vst [vmem:[%s207 + $0xdc] sm:$0xf] %v1949
        %2014 = vst [vmem:[%s207 + $0xe0] sm:$0xf] %v1950
        %2015 = vst [vmem:[%s207 + $0xe4] sm:$0xf] %v1951
        %2016 = vst [vmem:[%s207 + $0xe8] sm:$0xf] %v1952
        %2017 = vst [vmem:[%s207 + $0xec] sm:$0xf] %v1953
        %2018 = vst [vmem:[%s207 + $0xf0] sm:$0xf] %v1954
        %2019 = vst [vmem:[%s207 + $0xf4] sm:$0xf] %v1955
        %2020 = vst [vmem:[%s207 + $0xf8] sm:$0xf] %v1956
        %2021 = vst [vmem:[%s207 + $0xfc] sm:$0xf] %v1957
        %s2022 = sand.u32 %s97, 1
        %s2023 = scalar_lea.sflag [#allocation4], %s2022
        %s2024 = sand.u32 %s97, 1
        %s2025 = smul.addr %s2024, 256
        %s2026 = scalar_lea.vmem [#allocation7], %s2025
        // Predicated region
        $region41: #{tpu_custom_call.1} parent=31 // pred_check
          %p2027 = pneg %p107
        $region42: #{tpu_custom_call.1} parent=31 // pred_check_branch
          %2029 = sbr.rel (%p2027) target = $region44
        $region43: #{tpu_custom_call.1} parent=31 // pred_region
          %s2030 = smul.u32 64, %s21
          %2032 = vsyncadd %s2023, 0
          %s2033 = smul.addr %s2030, 4
          %s2034 = scalar_lea.hbm %s3, %s2033
          %s2035 = sshll.u32 %s2026, 4
          %s2036 = int_to_ptr.vmem [resolvable:$true] %s2035
          %s2037 = sshll.u32 %s2034, 4
          %s2038 = int_to_ptr.hbm [resolvable:$true] %s2037
          %2043 = dma.vmem_to_hbm [thread:$0]  %s2036, 4096, %s2038, %s2023, 64, 64, 4
        $region44: #{tpu_custom_call.1} parent=31 // pred_fallthru
          _
      $region32: #{tpu_custom_call.1} parent=5 // pred_fallthru
        _
      %p2044 = scmp.le.s32.totalorder 2, %s16
      // Predicated region
      $region45: #{tpu_custom_call.1} parent=5 // pred_check
        %p2045 = pneg %p2044
      $region46: #{tpu_custom_call.1} parent=5 // pred_check_branch
        %2047 = sbr.rel (%p2045) target = $region48
      $region47: #{tpu_custom_call.1} parent=5 // pred_region
        %s2048 = ssub.s32 %s16, 2
        // Predicated region
        $region49: #{tpu_custom_call.1} parent=47 // pred_check
          %p2049 = pneg %p113
        $region50: #{tpu_custom_call.1} parent=47 // pred_check_branch
          %2051 = sbr.rel (%p2049) target = $region52
        $region51: #{tpu_custom_call.1} parent=47 // pred_region
          %s2052 = sand.u32 %s98, 1
          %s2053 = scalar_lea.sflag [#allocation4], %s2052
          %s2054 = sand.u32 %s98, 1
          %s2055 = smul.addr %s2054, 256
          %s2056 = scalar_lea.vmem [#allocation7], %s2055
          %2058 = dma.done %s2053, 4096
        $region52: #{tpu_custom_call.1} parent=47 // pred_fallthru
          _
      $region48: #{tpu_custom_call.1} parent=5 // pred_fallthru
        _
    $region6: #{tpu_custom_call.1} parent=1 // loop_footer
      %s20 = sadd.s32 1, %s16
    $region7: #{tpu_custom_call.1} parent=1 // loop_footer_branch
      %15 = sbr.rel target = $region3
    $region8: #{tpu_custom_call.1} parent=1 // loop_exit
      _
    %2059 = vsyncpa [#allocation3], 1
    %s2060 = scalar_lea.sflag [#allocation3], 1
    %2061 = vsyncpa %s2060, 1
    %2062 = vsyncpa [#allocation6], 1
    %2063 = vsyncpa [#allocation4], 1
    %s2064 = scalar_lea.sflag [#allocation4], 1
    %2065 = vsyncpa %s2064, 1

</llo_original>
